<compile_context>
chip_gen: v6e
topology: v6e:2x2x1
jax: 0.10.0
libtpu: 0.0.40
codegen_flags: <defaults>
</compile_context>

<pallas_src>
import functools

import jax
import jax.numpy as jnp
from jax import lax
from jax.experimental import pallas as pl
from jax.experimental.pallas import tpu as pltpu


def quanet_fused_kernel(*refs, seq, bchunk, hidden, num_layers, n_ff):
    """Fully fused QuaNet forward (eval mode) for one batch chunk of 8 rows.

    refs layout (all VMEM):
      u0    (1, seq*B, 2*in0) bf16   combined layer-0 input  [x(t=s) | x(t=S-1-s)]
      stats (1, B, stats)     f32
      per LSTM layer: wx_comb (K_l, 8H) bf16, whh_comb (2H, 8H) bf16,
                      bias_comb (1, 8H) f32
      FF head: (w_k, b_k) * n_ff, w_out, b_out
      out   (1, B, 1) f32
    """
    f32 = jnp.float32
    bf16 = jnp.bfloat16
    H = hidden
    B = bchunk

    # ---- parse refs --------------------------------------------------------
    idx = 0
    u0_ref = refs[idx]; idx += 1
    stats_ref = refs[idx]; idx += 1
    lstm_refs = []
    for _ in range(num_layers):
        lstm_refs.append(refs[idx:idx + 3])
        idx += 3
    ff_refs = []
    for _ in range(n_ff):
        ff_refs.append((refs[idx], refs[idx + 1]))
        idx += 2
    wout_ref, bout_ref = refs[idx], refs[idx + 1]; idx += 2
    out_ref = refs[idx]

    # Combined gate lane layout: [i_f i_b | f_f f_b | g_f g_b | o_f o_b];
    # g-gate (tanh) lanes are [4H, 6H).  Hoisted once.
    lane = lax.broadcasted_iota(jnp.int32, (B, 8 * H), 1)
    g_mask = jnp.logical_and(lane >= 4 * H, lane < 6 * H)

    # ---- bidirectional LSTM stack ------------------------------------------
    u_comb = u0_ref[0]                       # (seq*B, K0) bf16
    hf_last = None
    hb_last = None
    for l in range(num_layers):
        wx_ref, whh_ref, bias_ref = lstm_refs[l]
        # Hoisted input projection -> combined per-step pre-activations
        # (bias folded in, off the recurrence critical path).
        gx = (jnp.dot(u_comb, wx_ref[...], preferred_element_type=f32)
              + bias_ref[...])                           # (seq*B, 8H) f32
        whh = whh_ref[...]                               # (2H, 8H) bf16, vreg-resident

        h = jnp.zeros((B, 2 * H), f32)                   # [h_f | h_b]
        c = jnp.zeros((B, 2 * H), f32)                   # [c_f | c_b]
        outs = [None] * seq

        # Statically unrolled time loop; one block-diagonal MXU call, one
        # sigmoid, two tanh (gates + cell) per step for BOTH directions.
        for s in range(seq):
            gates = (jnp.dot(h.astype(bf16), whh, preferred_element_type=f32)
                     + gx[s * B:(s + 1) * B])            # aligned 8-row slice
            sig = jax.nn.sigmoid(gates)                  # one EUP pass, 8H wide
            th = jnp.tanh(gates)                         # one EUP pass, 8H wide
            act = jnp.where(g_mask, th, sig)
            i_g = act[:, 0 * H:2 * H]                    # [i_f | i_b]
            f_g = act[:, 2 * H:4 * H]                    # [f_f | f_b]
            g_g = act[:, 4 * H:6 * H]                    # [g_f | g_b]
            o_g = act[:, 6 * H:8 * H]                    # [o_f | o_b]
            c = f_g * c + i_g * g_g
            h = o_g * jnp.tanh(c)                        # fused tanh, both dirs
            outs[s] = h

        if l < num_layers - 1:
            # outs[s] = [h_f(t=s) | h_b(t=seq-1-s)].  Next layer's combined
            # input row block s is [outs[s] | outs[seq-1-s]]; the direction /
            # time bookkeeping is baked into the packed next-layer weights.
            a_fwd = jnp.concatenate(outs, axis=0)        # (seq*B, 2H)
            a_rev = jnp.concatenate(outs[::-1], axis=0)  # (seq*B, 2H)
            u_comb = jnp.concatenate([a_fwd, a_rev], axis=1).astype(bf16)
        else:
            hf_last = outs[seq - 1][:, :H]               # fwd half of rnn_output[-1]
            hb_last = outs[0][:, H:]                     # bwd half of rnn_output[-1]

    # ---- FF head (eval mode: dropout = identity) ----------------------------
    a = jnp.concatenate([stats_ref[0], hf_last, hb_last], axis=1)
    for w_ref, b_ref in ff_refs:
        a = jnp.maximum(
            jnp.dot(a.astype(bf16), w_ref[...], preferred_element_type=f32)
            + b_ref[...], 0.0)
    y = (jnp.dot(a.astype(bf16), wout_ref[...], preferred_element_type=f32)
         + bout_ref[...])
    out_ref[0] = jnp.clip(y, 0.0, 1.0)                   # eval-mode clamp


# ----------------------------------------------------------------------------
# Host-side weight packing: gate/direction-interleaved combined matrices.
# Column index = gate*2H + direction*H + offset  (gate order i, f, g, o).
# ----------------------------------------------------------------------------
def _pack_gate_interleaved(pieces, n_rows, H, dtype):
    """pieces: list of (row0, row1, direction, weight(row1-row0, 4H))."""
    z = jnp.zeros((n_rows, 4, 2, H), jnp.float32)
    for row0, row1, direction, w in pieces:
        z = z.at[row0:row1, :, direction, :].set(
            w.reshape(row1 - row0, 4, H).astype(jnp.float32))
    return z.reshape(n_rows, 8 * H).astype(dtype)


def quanet_forward(x, stats, params):
    """x: (batch, seq, input_size), stats: (batch, 16) -> (batch,) prevalence."""
    f32, bf16 = jnp.float32, jnp.bfloat16
    B, seq, in_dim = x.shape
    H = params["lstm"][0]["fwd"][1].shape[0]
    num_layers = len(params["lstm"])
    ff_ws, ff_bs = params["ff_w"], params["ff_b"]
    n_ff = len(ff_ws)
    stats_size = stats.shape[1]

    # Pad batch to the 8-row sublane width and chunk by 8; the chunk axis is a
    # parallel grid dimension (keeps both v7x TensorCores busy for many bags).
    BCHUNK = 8
    bpad = ((B + BCHUNK - 1) // BCHUNK) * BCHUNK
    nchunks = bpad // BCHUNK

    xt = jnp.transpose(x, (1, 0, 2)).astype(f32)             # (seq, B, in)
    xp = jnp.zeros((seq, bpad, in_dim), f32).at[:, :B].set(xt)
    # Combined layer-0 input: row block s = [x(t=s) | x(t=seq-1-s)].
    u0 = jnp.concatenate([xp, xp[::-1]], axis=-1)             # (seq, bpad, 2*in)
    u0 = (u0.reshape(seq, nchunks, BCHUNK, 2 * in_dim)
            .transpose(1, 0, 2, 3)
            .reshape(nchunks, seq * BCHUNK, 2 * in_dim)
            .astype(bf16))

    sp = jnp.zeros((bpad, stats_size), f32).at[:B].set(stats.astype(f32))
    sp = sp.reshape(nchunks, BCHUNK, stats_size)

    args = [u0, sp]
    for l, layer in enumerate(params["lstm"]):
        wih_f, whh_f, b_f = layer["fwd"]
        wih_b, whh_b, b_b = layer["bwd"]
        if l == 0:
            k_in = wih_f.shape[0]
            wx = _pack_gate_interleaved(
                [(0, k_in, 0, wih_f), (k_in, 2 * k_in, 1, wih_b)],
                2 * k_in, H, bf16)
        else:
            # u_comb lanes for layer >= 1: [hf(s) | hb(S-1-s) | hf(S-1-s) | hb(s)]
            wx = _pack_gate_interleaved(
                [(0, H, 0, wih_f[:H]), (3 * H, 4 * H, 0, wih_f[H:]),
                 (2 * H, 3 * H, 1, wih_b[:H]), (H, 2 * H, 1, wih_b[H:])],
                4 * H, H, bf16)
        whh = _pack_gate_interleaved(
            [(0, H, 0, whh_f), (H, 2 * H, 1, whh_b)], 2 * H, H, bf16)
        bias = _pack_gate_interleaved(
            [(0, 1, 0, b_f), (0, 1, 1, b_b)], 1, H, f32)
        args += [wx, whh, bias]
    for w, b in zip(ff_ws, ff_bs):
        args += [w.astype(bf16), b]
    args += [params["out_w"].astype(bf16), params["out_b"]]

    def _rep_spec(a):
        nd = a.ndim
        return pl.BlockSpec(a.shape, lambda i, _nd=nd: (0,) * _nd)

    in_specs = [
        pl.BlockSpec((1, seq * BCHUNK, 2 * in_dim), lambda i: (i, 0, 0)),
        pl.BlockSpec((1, BCHUNK, stats_size), lambda i: (i, 0, 0)),
    ] + [_rep_spec(a) for a in args[2:]]

    kernel = functools.partial(
        quanet_fused_kernel, seq=seq, bchunk=BCHUNK, hidden=H,
        num_layers=num_layers, n_ff=n_ff)

    out = pl.pallas_call(
        kernel,
        out_shape=jax.ShapeDtypeStruct((nchunks, BCHUNK, 1), jnp.float32),
        grid=(nchunks,),
        in_specs=in_specs,
        out_specs=pl.BlockSpec((1, BCHUNK, 1), lambda i: (i, 0, 0)),
        compiler_params=pltpu.CompilerParams(
            dimension_semantics=("parallel",)),
    )(*args)
    return out.reshape(bpad)[:B]


# ----------------------------------------------------------------------------
# Pure-JAX reference (same math, same bf16 matmul inputs) for correctness.
# ----------------------------------------------------------------------------
def quanet_reference(x, stats, params):
    bf16, f32 = jnp.bfloat16, jnp.float32

    def mm(a, w):
        return jnp.dot(a.astype(bf16), w.astype(bf16),
                       preferred_element_type=f32)

    layer_in = jnp.transpose(x, (1, 0, 2))
    seq = layer_in.shape[0]
    for layer in params["lstm"]:
        outs = []
        for direction in ("fwd", "bwd"):
            w_ih, w_hh, b = layer[direction]
            H = w_hh.shape[0]
            h = jnp.zeros((layer_in.shape[1], H), f32)
            c = jnp.zeros_like(h)
            ts = range(seq - 1, -1, -1) if direction == "bwd" else range(seq)
            out_steps = [None] * seq
            for t in ts:
                g = mm(layer_in[t], w_ih) + mm(h, w_hh) + b
                i_g = jax.nn.sigmoid(g[:, 0 * H:1 * H])
                f_g = jax.nn.sigmoid(g[:, 1 * H:2 * H])
                g_g = jnp.tanh(g[:, 2 * H:3 * H])
                o_g = jax.nn.sigmoid(g[:, 3 * H:4 * H])
                c = f_g * c + i_g * g_g
                h = o_g * jnp.tanh(c)
                out_steps[t] = h
            outs.append(jnp.stack(out_steps, axis=0))
        layer_in = jnp.concatenate(outs, axis=-1)
    a = jnp.concatenate([stats, layer_in[-1]], axis=1)
    for w, b in zip(params["ff_w"], params["ff_b"]):
        a = jnp.maximum(mm(a, w) + b, 0.0)
    y = mm(a, params["out_w"]) + params["out_b"]
    return jnp.clip(y.reshape(-1), 0.0, 1.0)


# ----------------------------------------------------------------------------
# Deterministic parameter construction (matching module __init__ shapes).
# ----------------------------------------------------------------------------
def make_params(key, *, input_size, hidden, num_layers, ff_sizes, stats_size):
    def uni(k, shape, scale):
        return jax.random.uniform(k, shape, jnp.float32, -scale, scale)

    scale = 1.0 / jnp.sqrt(hidden)
    params = {"lstm": []}
    in_dim = input_size
    for _ in range(num_layers):
        layer = {}
        for direction in ("fwd", "bwd"):
            key, k1, k2, k3 = jax.random.split(key, 4)
            layer[direction] = (
                uni(k1, (in_dim, 4 * hidden), scale),   # W_ih^T
                uni(k2, (hidden, 4 * hidden), scale),   # W_hh^T
                uni(k3, (1, 4 * hidden), scale),        # b_ih + b_hh combined
            )
        params["lstm"].append(layer)
        in_dim = 2 * hidden                              # bidirectional

    prev = 2 * hidden + stats_size
    ff_w, ff_b = [], []
    for size in ff_sizes:
        key, k1, k2 = jax.random.split(key, 3)
        s = 1.0 / jnp.sqrt(prev)
        ff_w.append(uni(k1, (prev, size), s))
        ff_b.append(uni(k2, (1, size), s))
        prev = size
    key, k1, k2 = jax.random.split(key, 3)
    s = 1.0 / jnp.sqrt(prev)
    params["ff_w"], params["ff_b"] = ff_w, ff_b
    params["out_w"] = uni(k1, (prev, 1), s)
    params["out_b"] = uni(k2, (1, 1), s)
    return params


if __name__ == "__main__":
    INPUTSIZE = 30                    # -> input_size = inputsize + 2 = 32
    INPUT_SIZE = INPUTSIZE + 2
    HIDDEN = 32
    NUM_LAYERS = 2
    FF_SIZES = [64, 32]
    STATS_SIZE = 8 * 2                # = 16
    BATCH, SEQ = 2, 8

    key = jax.random.PRNGKey(0)
    key, kx, ks, kp = jax.random.split(key, 4)
    x = jax.random.normal(kx, (BATCH, SEQ, INPUT_SIZE), jnp.float32)
    stats = jax.random.normal(ks, (BATCH, STATS_SIZE), jnp.float32)
    params = make_params(kp, input_size=INPUT_SIZE, hidden=HIDDEN,
                         num_layers=NUM_LAYERS, ff_sizes=FF_SIZES,
                         stats_size=STATS_SIZE)

    prevalence = jax.block_until_ready(quanet_forward(x, stats, params))
    ref = jax.block_until_ready(quanet_reference(x, stats, params))

    assert prevalence.shape == (BATCH,)
    assert jnp.allclose(prevalence, ref, atol=1e-2, rtol=1e-2), (prevalence, ref)

    print("KERNEL_OK")
</pallas_src>

<mosaic_0001>
module attributes {stable_mosaic.version = 11 : i64} {
  func.func @quanet_fused_kernel(%arg0: i32, %arg1: memref<1x64x64xbf16, #tpu.memory_space<vmem>>, %arg2: memref<1x8x16xf32, #tpu.memory_space<vmem>>, %arg3: memref<64x256xbf16, #tpu.memory_space<vmem>>, %arg4: memref<64x256xbf16, #tpu.memory_space<vmem>>, %arg5: memref<1x256xf32, #tpu.memory_space<vmem>>, %arg6: memref<128x256xbf16, #tpu.memory_space<vmem>>, %arg7: memref<64x256xbf16, #tpu.memory_space<vmem>>, %arg8: memref<1x256xf32, #tpu.memory_space<vmem>>, %arg9: memref<80x64xbf16, #tpu.memory_space<vmem>>, %arg10: memref<1x64xf32, #tpu.memory_space<vmem>>, %arg11: memref<64x32xbf16, #tpu.memory_space<vmem>>, %arg12: memref<1x32xf32, #tpu.memory_space<vmem>>, %arg13: memref<32x1xbf16, #tpu.memory_space<vmem>>, %arg14: memref<1x1xf32, #tpu.memory_space<vmem>>, %arg15: memref<1x8x1xf32, #tpu.memory_space<vmem>>) attributes {dimension_semantics = [#tpu.dimension_semantics<parallel>], iteration_bounds = array<i64: 1>, scalar_prefetch = 0 : i64, scratch_operands = 0 : i64, tpu.core_type = #tpu.core_type<tc>, window_params = [{transform_indices = @transform_0, window_bounds = array<i64: 1, 64, 64>}, {transform_indices = @transform_1, window_bounds = array<i64: 1, 8, 16>}, {pipeline_mode = #tpu.pipeline_mode<synchronous>, transform_indices = @transform_2, window_bounds = array<i64: 64, 256>}, {pipeline_mode = #tpu.pipeline_mode<synchronous>, transform_indices = @transform_3, window_bounds = array<i64: 64, 256>}, {pipeline_mode = #tpu.pipeline_mode<synchronous>, transform_indices = @transform_4, window_bounds = array<i64: 1, 256>}, {pipeline_mode = #tpu.pipeline_mode<synchronous>, transform_indices = @transform_5, window_bounds = array<i64: 128, 256>}, {pipeline_mode = #tpu.pipeline_mode<synchronous>, transform_indices = @transform_6, window_bounds = array<i64: 64, 256>}, {pipeline_mode = #tpu.pipeline_mode<synchronous>, transform_indices = @transform_7, window_bounds = array<i64: 1, 256>}, {pipeline_mode = #tpu.pipeline_mode<synchronous>, transform_indices = @transform_8, window_bounds = array<i64: 80, 64>}, {pipeline_mode = #tpu.pipeline_mode<synchronous>, transform_indices = @transform_9, window_bounds = array<i64: 1, 64>}, {pipeline_mode = #tpu.pipeline_mode<synchronous>, transform_indices = @transform_10, window_bounds = array<i64: 64, 32>}, {pipeline_mode = #tpu.pipeline_mode<synchronous>, transform_indices = @transform_11, window_bounds = array<i64: 1, 32>}, {pipeline_mode = #tpu.pipeline_mode<synchronous>, transform_indices = @transform_12, window_bounds = array<i64: 32, 1>}, {pipeline_mode = #tpu.pipeline_mode<synchronous>, transform_indices = @transform_13, window_bounds = array<i64: 1, 1>}, {transform_indices = @transform_14, window_bounds = array<i64: 1, 8, 1>}]} {
    %0 = tpu.iota {dimensions = array<i32: 1>} : vector<8x256xi32>
    %c128_i32 = arith.constant 128 : i32
    %1 = vector.broadcast %c128_i32 : i32 to vector<8x256xi32>
    %2 = arith.cmpi sge, %0, %1 : vector<8x256xi32>
    %c192_i32 = arith.constant 192 : i32
    %3 = vector.broadcast %c192_i32 : i32 to vector<8x256xi32>
    %4 = arith.cmpi slt, %0, %3 : vector<8x256xi32>
    %5 = arith.andi %2, %4 : vector<8x256xi1>
    %c0 = arith.constant 0 : index
    %c0_0 = arith.constant 0 : index
    %c0_1 = arith.constant 0 : index
    %6 = vector.load %arg1[%c0, %c0_0, %c0_1] : memref<1x64x64xbf16, #tpu.memory_space<vmem>>, vector<1x64x64xbf16>
    %7 = vector.shape_cast %6 : vector<1x64x64xbf16> to vector<64x64xbf16>
    %c0_2 = arith.constant 0 : index
    %c0_3 = arith.constant 0 : index
    %8 = vector.load %arg3[%c0_2, %c0_3] : memref<64x256xbf16, #tpu.memory_space<vmem>>, vector<64x256xbf16>
    %cst = arith.constant dense<0.000000e+00> : vector<64x256xf32>
    %9 = tpu.matmul %7, %8, %cst {dimension_numbers = #tpu.dot_dimension_numbers<[1], [0], [0], [1], [0, 0, 1, 1], [], []>} : vector<64x64xbf16>, vector<64x256xbf16>, vector<64x256xf32> -> vector<64x256xf32>
    %c0_4 = arith.constant 0 : index
    %c0_5 = arith.constant 0 : index
    %10 = vector.load %arg5[%c0_4, %c0_5] : memref<1x256xf32, #tpu.memory_space<vmem>>, vector<1x256xf32>
    %11 = vector.broadcast %10 : vector<1x256xf32> to vector<64x256xf32>
    %12 = arith.addf %9, %11 : vector<64x256xf32>
    %c0_6 = arith.constant 0 : index
    %c0_7 = arith.constant 0 : index
    %13 = vector.load %arg4[%c0_6, %c0_7] : memref<64x256xbf16, #tpu.memory_space<vmem>>, vector<64x256xbf16>
    %cst_8 = arith.constant 0.000000e+00 : f32
    %14 = vector.broadcast %cst_8 : f32 to vector<8x64xf32>
    %cst_9 = arith.constant 0.000000e+00 : f32
    %15 = vector.broadcast %cst_9 : f32 to vector<8x64xf32>
    %16 = arith.truncf %14 : vector<8x64xf32> to vector<8x64xbf16>
    %cst_10 = arith.constant dense<0.000000e+00> : vector<8x256xf32>
    %17 = tpu.matmul %16, %13, %cst_10 {dimension_numbers = #tpu.dot_dimension_numbers<[1], [0], [0], [1], [0, 0, 1, 1], [], []>} : vector<8x64xbf16>, vector<64x256xbf16>, vector<8x256xf32> -> vector<8x256xf32>
    %18 = vector.extract_strided_slice %12 {offsets = [0, 0], sizes = [8, 256], strides = [1, 1]} : vector<64x256xf32> to vector<8x256xf32>
    %19 = arith.addf %17, %18 : vector<8x256xf32>
    %20 = arith.negf %19 : vector<8x256xf32>
    %21 = math.exp %20 : vector<8x256xf32>
    %cst_11 = arith.constant 1.000000e+00 : f32
    %22 = vector.broadcast %cst_11 : f32 to vector<8x256xf32>
    %23 = arith.addf %22, %21 : vector<8x256xf32>
    %24 = arith.divf %22, %23 : vector<8x256xf32>
    %25 = math.tanh %19 : vector<8x256xf32>
    %26 = arith.select %5, %25, %24 : vector<8x256xi1>, vector<8x256xf32>
    %27 = vector.extract_strided_slice %26 {offsets = [0, 0], sizes = [8, 64], strides = [1, 1]} : vector<8x256xf32> to vector<8x64xf32>
    %28 = vector.extract_strided_slice %26 {offsets = [0, 64], sizes = [8, 64], strides = [1, 1]} : vector<8x256xf32> to vector<8x64xf32>
    %29 = vector.extract_strided_slice %26 {offsets = [0, 128], sizes = [8, 64], strides = [1, 1]} : vector<8x256xf32> to vector<8x64xf32>
    %30 = vector.extract_strided_slice %26 {offsets = [0, 192], sizes = [8, 64], strides = [1, 1]} : vector<8x256xf32> to vector<8x64xf32>
    %31 = arith.mulf %28, %15 : vector<8x64xf32>
    %32 = arith.mulf %27, %29 : vector<8x64xf32>
    %33 = arith.addf %31, %32 : vector<8x64xf32>
    %34 = math.tanh %33 : vector<8x64xf32>
    %35 = arith.mulf %30, %34 : vector<8x64xf32>
    %36 = arith.truncf %35 : vector<8x64xf32> to vector<8x64xbf16>
    %cst_12 = arith.constant dense<0.000000e+00> : vector<8x256xf32>
    %37 = tpu.matmul %36, %13, %cst_12 {dimension_numbers = #tpu.dot_dimension_numbers<[1], [0], [0], [1], [0, 0, 1, 1], [], []>} : vector<8x64xbf16>, vector<64x256xbf16>, vector<8x256xf32> -> vector<8x256xf32>
    %38 = vector.extract_strided_slice %12 {offsets = [8, 0], sizes = [8, 256], strides = [1, 1]} : vector<64x256xf32> to vector<8x256xf32>
    %39 = arith.addf %37, %38 : vector<8x256xf32>
    %40 = arith.negf %39 : vector<8x256xf32>
    %41 = math.exp %40 : vector<8x256xf32>
    %cst_13 = arith.constant 1.000000e+00 : f32
    %42 = vector.broadcast %cst_13 : f32 to vector<8x256xf32>
    %43 = arith.addf %42, %41 : vector<8x256xf32>
    %44 = arith.divf %42, %43 : vector<8x256xf32>
    %45 = math.tanh %39 : vector<8x256xf32>
    %46 = arith.select %5, %45, %44 : vector<8x256xi1>, vector<8x256xf32>
    %47 = vector.extract_strided_slice %46 {offsets = [0, 0], sizes = [8, 64], strides = [1, 1]} : vector<8x256xf32> to vector<8x64xf32>
    %48 = vector.extract_strided_slice %46 {offsets = [0, 64], sizes = [8, 64], strides = [1, 1]} : vector<8x256xf32> to vector<8x64xf32>
    %49 = vector.extract_strided_slice %46 {offsets = [0, 128], sizes = [8, 64], strides = [1, 1]} : vector<8x256xf32> to vector<8x64xf32>
    %50 = vector.extract_strided_slice %46 {offsets = [0, 192], sizes = [8, 64], strides = [1, 1]} : vector<8x256xf32> to vector<8x64xf32>
    %51 = arith.mulf %48, %33 : vector<8x64xf32>
    %52 = arith.mulf %47, %49 : vector<8x64xf32>
    %53 = arith.addf %51, %52 : vector<8x64xf32>
    %54 = math.tanh %53 : vector<8x64xf32>
    %55 = arith.mulf %50, %54 : vector<8x64xf32>
    %56 = arith.truncf %55 : vector<8x64xf32> to vector<8x64xbf16>
    %cst_14 = arith.constant dense<0.000000e+00> : vector<8x256xf32>
    %57 = tpu.matmul %56, %13, %cst_14 {dimension_numbers = #tpu.dot_dimension_numbers<[1], [0], [0], [1], [0, 0, 1, 1], [], []>} : vector<8x64xbf16>, vector<64x256xbf16>, vector<8x256xf32> -> vector<8x256xf32>
    %58 = vector.extract_strided_slice %12 {offsets = [16, 0], sizes = [8, 256], strides = [1, 1]} : vector<64x256xf32> to vector<8x256xf32>
    %59 = arith.addf %57, %58 : vector<8x256xf32>
    %60 = arith.negf %59 : vector<8x256xf32>
    %61 = math.exp %60 : vector<8x256xf32>
    %cst_15 = arith.constant 1.000000e+00 : f32
    %62 = vector.broadcast %cst_15 : f32 to vector<8x256xf32>
    %63 = arith.addf %62, %61 : vector<8x256xf32>
    %64 = arith.divf %62, %63 : vector<8x256xf32>
    %65 = math.tanh %59 : vector<8x256xf32>
    %66 = arith.select %5, %65, %64 : vector<8x256xi1>, vector<8x256xf32>
    %67 = vector.extract_strided_slice %66 {offsets = [0, 0], sizes = [8, 64], strides = [1, 1]} : vector<8x256xf32> to vector<8x64xf32>
    %68 = vector.extract_strided_slice %66 {offsets = [0, 64], sizes = [8, 64], strides = [1, 1]} : vector<8x256xf32> to vector<8x64xf32>
    %69 = vector.extract_strided_slice %66 {offsets = [0, 128], sizes = [8, 64], strides = [1, 1]} : vector<8x256xf32> to vector<8x64xf32>
    %70 = vector.extract_strided_slice %66 {offsets = [0, 192], sizes = [8, 64], strides = [1, 1]} : vector<8x256xf32> to vector<8x64xf32>
    %71 = arith.mulf %68, %53 : vector<8x64xf32>
    %72 = arith.mulf %67, %69 : vector<8x64xf32>
    %73 = arith.addf %71, %72 : vector<8x64xf32>
    %74 = math.tanh %73 : vector<8x64xf32>
    %75 = arith.mulf %70, %74 : vector<8x64xf32>
    %76 = arith.truncf %75 : vector<8x64xf32> to vector<8x64xbf16>
    %cst_16 = arith.constant dense<0.000000e+00> : vector<8x256xf32>
    %77 = tpu.matmul %76, %13, %cst_16 {dimension_numbers = #tpu.dot_dimension_numbers<[1], [0], [0], [1], [0, 0, 1, 1], [], []>} : vector<8x64xbf16>, vector<64x256xbf16>, vector<8x256xf32> -> vector<8x256xf32>
    %78 = vector.extract_strided_slice %12 {offsets = [24, 0], sizes = [8, 256], strides = [1, 1]} : vector<64x256xf32> to vector<8x256xf32>
    %79 = arith.addf %77, %78 : vector<8x256xf32>
    %80 = arith.negf %79 : vector<8x256xf32>
    %81 = math.exp %80 : vector<8x256xf32>
    %cst_17 = arith.constant 1.000000e+00 : f32
    %82 = vector.broadcast %cst_17 : f32 to vector<8x256xf32>
    %83 = arith.addf %82, %81 : vector<8x256xf32>
    %84 = arith.divf %82, %83 : vector<8x256xf32>
    %85 = math.tanh %79 : vector<8x256xf32>
    %86 = arith.select %5, %85, %84 : vector<8x256xi1>, vector<8x256xf32>
    %87 = vector.extract_strided_slice %86 {offsets = [0, 0], sizes = [8, 64], strides = [1, 1]} : vector<8x256xf32> to vector<8x64xf32>
    %88 = vector.extract_strided_slice %86 {offsets = [0, 64], sizes = [8, 64], strides = [1, 1]} : vector<8x256xf32> to vector<8x64xf32>
    %89 = vector.extract_strided_slice %86 {offsets = [0, 128], sizes = [8, 64], strides = [1, 1]} : vector<8x256xf32> to vector<8x64xf32>
    %90 = vector.extract_strided_slice %86 {offsets = [0, 192], sizes = [8, 64], strides = [1, 1]} : vector<8x256xf32> to vector<8x64xf32>
    %91 = arith.mulf %88, %73 : vector<8x64xf32>
    %92 = arith.mulf %87, %89 : vector<8x64xf32>
    %93 = arith.addf %91, %92 : vector<8x64xf32>
    %94 = math.tanh %93 : vector<8x64xf32>
    %95 = arith.mulf %90, %94 : vector<8x64xf32>
    %96 = arith.truncf %95 : vector<8x64xf32> to vector<8x64xbf16>
    %cst_18 = arith.constant dense<0.000000e+00> : vector<8x256xf32>
    %97 = tpu.matmul %96, %13, %cst_18 {dimension_numbers = #tpu.dot_dimension_numbers<[1], [0], [0], [1], [0, 0, 1, 1], [], []>} : vector<8x64xbf16>, vector<64x256xbf16>, vector<8x256xf32> -> vector<8x256xf32>
    %98 = vector.extract_strided_slice %12 {offsets = [32, 0], sizes = [8, 256], strides = [1, 1]} : vector<64x256xf32> to vector<8x256xf32>
    %99 = arith.addf %97, %98 : vector<8x256xf32>
    %100 = arith.negf %99 : vector<8x256xf32>
    %101 = math.exp %100 : vector<8x256xf32>
    %cst_19 = arith.constant 1.000000e+00 : f32
    %102 = vector.broadcast %cst_19 : f32 to vector<8x256xf32>
    %103 = arith.addf %102, %101 : vector<8x256xf32>
    %104 = arith.divf %102, %103 : vector<8x256xf32>
    %105 = math.tanh %99 : vector<8x256xf32>
    %106 = arith.select %5, %105, %104 : vector<8x256xi1>, vector<8x256xf32>
    %107 = vector.extract_strided_slice %106 {offsets = [0, 0], sizes = [8, 64], strides = [1, 1]} : vector<8x256xf32> to vector<8x64xf32>
    %108 = vector.extract_strided_slice %106 {offsets = [0, 64], sizes = [8, 64], strides = [1, 1]} : vector<8x256xf32> to vector<8x64xf32>
    %109 = vector.extract_strided_slice %106 {offsets = [0, 128], sizes = [8, 64], strides = [1, 1]} : vector<8x256xf32> to vector<8x64xf32>
    %110 = vector.extract_strided_slice %106 {offsets = [0, 192], sizes = [8, 64], strides = [1, 1]} : vector<8x256xf32> to vector<8x64xf32>
    %111 = arith.mulf %108, %93 : vector<8x64xf32>
    %112 = arith.mulf %107, %109 : vector<8x64xf32>
    %113 = arith.addf %111, %112 : vector<8x64xf32>
    %114 = math.tanh %113 : vector<8x64xf32>
    %115 = arith.mulf %110, %114 : vector<8x64xf32>
    %116 = arith.truncf %115 : vector<8x64xf32> to vector<8x64xbf16>
    %cst_20 = arith.constant dense<0.000000e+00> : vector<8x256xf32>
    %117 = tpu.matmul %116, %13, %cst_20 {dimension_numbers = #tpu.dot_dimension_numbers<[1], [0], [0], [1], [0, 0, 1, 1], [], []>} : vector<8x64xbf16>, vector<64x256xbf16>, vector<8x256xf32> -> vector<8x256xf32>
    %118 = vector.extract_strided_slice %12 {offsets = [40, 0], sizes = [8, 256], strides = [1, 1]} : vector<64x256xf32> to vector<8x256xf32>
    %119 = arith.addf %117, %118 : vector<8x256xf32>
    %120 = arith.negf %119 : vector<8x256xf32>
    %121 = math.exp %120 : vector<8x256xf32>
    %cst_21 = arith.constant 1.000000e+00 : f32
    %122 = vector.broadcast %cst_21 : f32 to vector<8x256xf32>
    %123 = arith.addf %122, %121 : vector<8x256xf32>
    %124 = arith.divf %122, %123 : vector<8x256xf32>
    %125 = math.tanh %119 : vector<8x256xf32>
    %126 = arith.select %5, %125, %124 : vector<8x256xi1>, vector<8x256xf32>
    %127 = vector.extract_strided_slice %126 {offsets = [0, 0], sizes = [8, 64], strides = [1, 1]} : vector<8x256xf32> to vector<8x64xf32>
    %128 = vector.extract_strided_slice %126 {offsets = [0, 64], sizes = [8, 64], strides = [1, 1]} : vector<8x256xf32> to vector<8x64xf32>
    %129 = vector.extract_strided_slice %126 {offsets = [0, 128], sizes = [8, 64], strides = [1, 1]} : vector<8x256xf32> to vector<8x64xf32>
    %130 = vector.extract_strided_slice %126 {offsets = [0, 192], sizes = [8, 64], strides = [1, 1]} : vector<8x256xf32> to vector<8x64xf32>
    %131 = arith.mulf %128, %113 : vector<8x64xf32>
    %132 = arith.mulf %127, %129 : vector<8x64xf32>
    %133 = arith.addf %131, %132 : vector<8x64xf32>
    %134 = math.tanh %133 : vector<8x64xf32>
    %135 = arith.mulf %130, %134 : vector<8x64xf32>
    %136 = arith.truncf %135 : vector<8x64xf32> to vector<8x64xbf16>
    %cst_22 = arith.constant dense<0.000000e+00> : vector<8x256xf32>
    %137 = tpu.matmul %136, %13, %cst_22 {dimension_numbers = #tpu.dot_dimension_numbers<[1], [0], [0], [1], [0, 0, 1, 1], [], []>} : vector<8x64xbf16>, vector<64x256xbf16>, vector<8x256xf32> -> vector<8x256xf32>
    %138 = vector.extract_strided_slice %12 {offsets = [48, 0], sizes = [8, 256], strides = [1, 1]} : vector<64x256xf32> to vector<8x256xf32>
    %139 = arith.addf %137, %138 : vector<8x256xf32>
    %140 = arith.negf %139 : vector<8x256xf32>
    %141 = math.exp %140 : vector<8x256xf32>
    %cst_23 = arith.constant 1.000000e+00 : f32
    %142 = vector.broadcast %cst_23 : f32 to vector<8x256xf32>
    %143 = arith.addf %142, %141 : vector<8x256xf32>
    %144 = arith.divf %142, %143 : vector<8x256xf32>
    %145 = math.tanh %139 : vector<8x256xf32>
    %146 = arith.select %5, %145, %144 : vector<8x256xi1>, vector<8x256xf32>
    %147 = vector.extract_strided_slice %146 {offsets = [0, 0], sizes = [8, 64], strides = [1, 1]} : vector<8x256xf32> to vector<8x64xf32>
    %148 = vector.extract_strided_slice %146 {offsets = [0, 64], sizes = [8, 64], strides = [1, 1]} : vector<8x256xf32> to vector<8x64xf32>
    %149 = vector.extract_strided_slice %146 {offsets = [0, 128], sizes = [8, 64], strides = [1, 1]} : vector<8x256xf32> to vector<8x64xf32>
    %150 = vector.extract_strided_slice %146 {offsets = [0, 192], sizes = [8, 64], strides = [1, 1]} : vector<8x256xf32> to vector<8x64xf32>
    %151 = arith.mulf %148, %133 : vector<8x64xf32>
    %152 = arith.mulf %147, %149 : vector<8x64xf32>
    %153 = arith.addf %151, %152 : vector<8x64xf32>
    %154 = math.tanh %153 : vector<8x64xf32>
    %155 = arith.mulf %150, %154 : vector<8x64xf32>
    %156 = arith.truncf %155 : vector<8x64xf32> to vector<8x64xbf16>
    %cst_24 = arith.constant dense<0.000000e+00> : vector<8x256xf32>
    %157 = tpu.matmul %156, %13, %cst_24 {dimension_numbers = #tpu.dot_dimension_numbers<[1], [0], [0], [1], [0, 0, 1, 1], [], []>} : vector<8x64xbf16>, vector<64x256xbf16>, vector<8x256xf32> -> vector<8x256xf32>
    %158 = vector.extract_strided_slice %12 {offsets = [56, 0], sizes = [8, 256], strides = [1, 1]} : vector<64x256xf32> to vector<8x256xf32>
    %159 = arith.addf %157, %158 : vector<8x256xf32>
    %160 = arith.negf %159 : vector<8x256xf32>
    %161 = math.exp %160 : vector<8x256xf32>
    %cst_25 = arith.constant 1.000000e+00 : f32
    %162 = vector.broadcast %cst_25 : f32 to vector<8x256xf32>
    %163 = arith.addf %162, %161 : vector<8x256xf32>
    %164 = arith.divf %162, %163 : vector<8x256xf32>
    %165 = math.tanh %159 : vector<8x256xf32>
    %166 = arith.select %5, %165, %164 : vector<8x256xi1>, vector<8x256xf32>
    %167 = vector.extract_strided_slice %166 {offsets = [0, 0], sizes = [8, 64], strides = [1, 1]} : vector<8x256xf32> to vector<8x64xf32>
    %168 = vector.extract_strided_slice %166 {offsets = [0, 64], sizes = [8, 64], strides = [1, 1]} : vector<8x256xf32> to vector<8x64xf32>
    %169 = vector.extract_strided_slice %166 {offsets = [0, 128], sizes = [8, 64], strides = [1, 1]} : vector<8x256xf32> to vector<8x64xf32>
    %170 = vector.extract_strided_slice %166 {offsets = [0, 192], sizes = [8, 64], strides = [1, 1]} : vector<8x256xf32> to vector<8x64xf32>
    %171 = arith.mulf %168, %153 : vector<8x64xf32>
    %172 = arith.mulf %167, %169 : vector<8x64xf32>
    %173 = arith.addf %171, %172 : vector<8x64xf32>
    %174 = math.tanh %173 : vector<8x64xf32>
    %175 = arith.mulf %170, %174 : vector<8x64xf32>
    %176 = tpu.concatenate %35, %55, %75, %95, %115, %135, %155, %175 in 0 : vector<8x64xf32>, vector<8x64xf32>, vector<8x64xf32>, vector<8x64xf32>, vector<8x64xf32>, vector<8x64xf32>, vector<8x64xf32>, vector<8x64xf32> -> vector<64x64xf32>
    %177 = tpu.concatenate %175, %155, %135, %115, %95, %75, %55, %35 in 0 : vector<8x64xf32>, vector<8x64xf32>, vector<8x64xf32>, vector<8x64xf32>, vector<8x64xf32>, vector<8x64xf32>, vector<8x64xf32>, vector<8x64xf32> -> vector<64x64xf32>
    %178 = tpu.concatenate %176, %177 in 1 : vector<64x64xf32>, vector<64x64xf32> -> vector<64x128xf32>
    %179 = arith.truncf %178 : vector<64x128xf32> to vector<64x128xbf16>
    %c0_26 = arith.constant 0 : index
    %c0_27 = arith.constant 0 : index
    %180 = vector.load %arg6[%c0_26, %c0_27] : memref<128x256xbf16, #tpu.memory_space<vmem>>, vector<128x256xbf16>
    %cst_28 = arith.constant dense<0.000000e+00> : vector<64x256xf32>
    %181 = tpu.matmul %179, %180, %cst_28 {dimension_numbers = #tpu.dot_dimension_numbers<[1], [0], [0], [1], [0, 0, 1, 1], [], []>} : vector<64x128xbf16>, vector<128x256xbf16>, vector<64x256xf32> -> vector<64x256xf32>
    %c0_29 = arith.constant 0 : index
    %c0_30 = arith.constant 0 : index
    %182 = vector.load %arg8[%c0_29, %c0_30] : memref<1x256xf32, #tpu.memory_space<vmem>>, vector<1x256xf32>
    %183 = vector.broadcast %182 : vector<1x256xf32> to vector<64x256xf32>
    %184 = arith.addf %181, %183 : vector<64x256xf32>
    %c0_31 = arith.constant 0 : index
    %c0_32 = arith.constant 0 : index
    %185 = vector.load %arg7[%c0_31, %c0_32] : memref<64x256xbf16, #tpu.memory_space<vmem>>, vector<64x256xbf16>
    %cst_33 = arith.constant 0.000000e+00 : f32
    %186 = vector.broadcast %cst_33 : f32 to vector<8x64xf32>
    %cst_34 = arith.constant 0.000000e+00 : f32
    %187 = vector.broadcast %cst_34 : f32 to vector<8x64xf32>
    %188 = arith.truncf %186 : vector<8x64xf32> to vector<8x64xbf16>
    %cst_35 = arith.constant dense<0.000000e+00> : vector<8x256xf32>
    %189 = tpu.matmul %188, %185, %cst_35 {dimension_numbers = #tpu.dot_dimension_numbers<[1], [0], [0], [1], [0, 0, 1, 1], [], []>} : vector<8x64xbf16>, vector<64x256xbf16>, vector<8x256xf32> -> vector<8x256xf32>
    %190 = vector.extract_strided_slice %184 {offsets = [0, 0], sizes = [8, 256], strides = [1, 1]} : vector<64x256xf32> to vector<8x256xf32>
    %191 = arith.addf %189, %190 : vector<8x256xf32>
    %192 = arith.negf %191 : vector<8x256xf32>
    %193 = math.exp %192 : vector<8x256xf32>
    %cst_36 = arith.constant 1.000000e+00 : f32
    %194 = vector.broadcast %cst_36 : f32 to vector<8x256xf32>
    %195 = arith.addf %194, %193 : vector<8x256xf32>
    %196 = arith.divf %194, %195 : vector<8x256xf32>
    %197 = math.tanh %191 : vector<8x256xf32>
    %198 = arith.select %5, %197, %196 : vector<8x256xi1>, vector<8x256xf32>
    %199 = vector.extract_strided_slice %198 {offsets = [0, 0], sizes = [8, 64], strides = [1, 1]} : vector<8x256xf32> to vector<8x64xf32>
    %200 = vector.extract_strided_slice %198 {offsets = [0, 64], sizes = [8, 64], strides = [1, 1]} : vector<8x256xf32> to vector<8x64xf32>
    %201 = vector.extract_strided_slice %198 {offsets = [0, 128], sizes = [8, 64], strides = [1, 1]} : vector<8x256xf32> to vector<8x64xf32>
    %202 = vector.extract_strided_slice %198 {offsets = [0, 192], sizes = [8, 64], strides = [1, 1]} : vector<8x256xf32> to vector<8x64xf32>
    %203 = arith.mulf %200, %187 : vector<8x64xf32>
    %204 = arith.mulf %199, %201 : vector<8x64xf32>
    %205 = arith.addf %203, %204 : vector<8x64xf32>
    %206 = math.tanh %205 : vector<8x64xf32>
    %207 = arith.mulf %202, %206 : vector<8x64xf32>
    %208 = arith.truncf %207 : vector<8x64xf32> to vector<8x64xbf16>
    %cst_37 = arith.constant dense<0.000000e+00> : vector<8x256xf32>
    %209 = tpu.matmul %208, %185, %cst_37 {dimension_numbers = #tpu.dot_dimension_numbers<[1], [0], [0], [1], [0, 0, 1, 1], [], []>} : vector<8x64xbf16>, vector<64x256xbf16>, vector<8x256xf32> -> vector<8x256xf32>
    %210 = vector.extract_strided_slice %184 {offsets = [8, 0], sizes = [8, 256], strides = [1, 1]} : vector<64x256xf32> to vector<8x256xf32>
    %211 = arith.addf %209, %210 : vector<8x256xf32>
    %212 = arith.negf %211 : vector<8x256xf32>
    %213 = math.exp %212 : vector<8x256xf32>
    %cst_38 = arith.constant 1.000000e+00 : f32
    %214 = vector.broadcast %cst_38 : f32 to vector<8x256xf32>
    %215 = arith.addf %214, %213 : vector<8x256xf32>
    %216 = arith.divf %214, %215 : vector<8x256xf32>
    %217 = math.tanh %211 : vector<8x256xf32>
    %218 = arith.select %5, %217, %216 : vector<8x256xi1>, vector<8x256xf32>
    %219 = vector.extract_strided_slice %218 {offsets = [0, 0], sizes = [8, 64], strides = [1, 1]} : vector<8x256xf32> to vector<8x64xf32>
    %220 = vector.extract_strided_slice %218 {offsets = [0, 64], sizes = [8, 64], strides = [1, 1]} : vector<8x256xf32> to vector<8x64xf32>
    %221 = vector.extract_strided_slice %218 {offsets = [0, 128], sizes = [8, 64], strides = [1, 1]} : vector<8x256xf32> to vector<8x64xf32>
    %222 = vector.extract_strided_slice %218 {offsets = [0, 192], sizes = [8, 64], strides = [1, 1]} : vector<8x256xf32> to vector<8x64xf32>
    %223 = arith.mulf %220, %205 : vector<8x64xf32>
    %224 = arith.mulf %219, %221 : vector<8x64xf32>
    %225 = arith.addf %223, %224 : vector<8x64xf32>
    %226 = math.tanh %225 : vector<8x64xf32>
    %227 = arith.mulf %222, %226 : vector<8x64xf32>
    %228 = arith.truncf %227 : vector<8x64xf32> to vector<8x64xbf16>
    %cst_39 = arith.constant dense<0.000000e+00> : vector<8x256xf32>
    %229 = tpu.matmul %228, %185, %cst_39 {dimension_numbers = #tpu.dot_dimension_numbers<[1], [0], [0], [1], [0, 0, 1, 1], [], []>} : vector<8x64xbf16>, vector<64x256xbf16>, vector<8x256xf32> -> vector<8x256xf32>
    %230 = vector.extract_strided_slice %184 {offsets = [16, 0], sizes = [8, 256], strides = [1, 1]} : vector<64x256xf32> to vector<8x256xf32>
    %231 = arith.addf %229, %230 : vector<8x256xf32>
    %232 = arith.negf %231 : vector<8x256xf32>
    %233 = math.exp %232 : vector<8x256xf32>
    %cst_40 = arith.constant 1.000000e+00 : f32
    %234 = vector.broadcast %cst_40 : f32 to vector<8x256xf32>
    %235 = arith.addf %234, %233 : vector<8x256xf32>
    %236 = arith.divf %234, %235 : vector<8x256xf32>
    %237 = math.tanh %231 : vector<8x256xf32>
    %238 = arith.select %5, %237, %236 : vector<8x256xi1>, vector<8x256xf32>
    %239 = vector.extract_strided_slice %238 {offsets = [0, 0], sizes = [8, 64], strides = [1, 1]} : vector<8x256xf32> to vector<8x64xf32>
    %240 = vector.extract_strided_slice %238 {offsets = [0, 64], sizes = [8, 64], strides = [1, 1]} : vector<8x256xf32> to vector<8x64xf32>
    %241 = vector.extract_strided_slice %238 {offsets = [0, 128], sizes = [8, 64], strides = [1, 1]} : vector<8x256xf32> to vector<8x64xf32>
    %242 = vector.extract_strided_slice %238 {offsets = [0, 192], sizes = [8, 64], strides = [1, 1]} : vector<8x256xf32> to vector<8x64xf32>
    %243 = arith.mulf %240, %225 : vector<8x64xf32>
    %244 = arith.mulf %239, %241 : vector<8x64xf32>
    %245 = arith.addf %243, %244 : vector<8x64xf32>
    %246 = math.tanh %245 : vector<8x64xf32>
    %247 = arith.mulf %242, %246 : vector<8x64xf32>
    %248 = arith.truncf %247 : vector<8x64xf32> to vector<8x64xbf16>
    %cst_41 = arith.constant dense<0.000000e+00> : vector<8x256xf32>
    %249 = tpu.matmul %248, %185, %cst_41 {dimension_numbers = #tpu.dot_dimension_numbers<[1], [0], [0], [1], [0, 0, 1, 1], [], []>} : vector<8x64xbf16>, vector<64x256xbf16>, vector<8x256xf32> -> vector<8x256xf32>
    %250 = vector.extract_strided_slice %184 {offsets = [24, 0], sizes = [8, 256], strides = [1, 1]} : vector<64x256xf32> to vector<8x256xf32>
    %251 = arith.addf %249, %250 : vector<8x256xf32>
    %252 = arith.negf %251 : vector<8x256xf32>
    %253 = math.exp %252 : vector<8x256xf32>
    %cst_42 = arith.constant 1.000000e+00 : f32
    %254 = vector.broadcast %cst_42 : f32 to vector<8x256xf32>
    %255 = arith.addf %254, %253 : vector<8x256xf32>
    %256 = arith.divf %254, %255 : vector<8x256xf32>
    %257 = math.tanh %251 : vector<8x256xf32>
    %258 = arith.select %5, %257, %256 : vector<8x256xi1>, vector<8x256xf32>
    %259 = vector.extract_strided_slice %258 {offsets = [0, 0], sizes = [8, 64], strides = [1, 1]} : vector<8x256xf32> to vector<8x64xf32>
    %260 = vector.extract_strided_slice %258 {offsets = [0, 64], sizes = [8, 64], strides = [1, 1]} : vector<8x256xf32> to vector<8x64xf32>
    %261 = vector.extract_strided_slice %258 {offsets = [0, 128], sizes = [8, 64], strides = [1, 1]} : vector<8x256xf32> to vector<8x64xf32>
    %262 = vector.extract_strided_slice %258 {offsets = [0, 192], sizes = [8, 64], strides = [1, 1]} : vector<8x256xf32> to vector<8x64xf32>
    %263 = arith.mulf %260, %245 : vector<8x64xf32>
    %264 = arith.mulf %259, %261 : vector<8x64xf32>
    %265 = arith.addf %263, %264 : vector<8x64xf32>
    %266 = math.tanh %265 : vector<8x64xf32>
    %267 = arith.mulf %262, %266 : vector<8x64xf32>
    %268 = arith.truncf %267 : vector<8x64xf32> to vector<8x64xbf16>
    %cst_43 = arith.constant dense<0.000000e+00> : vector<8x256xf32>
    %269 = tpu.matmul %268, %185, %cst_43 {dimension_numbers = #tpu.dot_dimension_numbers<[1], [0], [0], [1], [0, 0, 1, 1], [], []>} : vector<8x64xbf16>, vector<64x256xbf16>, vector<8x256xf32> -> vector<8x256xf32>
    %270 = vector.extract_strided_slice %184 {offsets = [32, 0], sizes = [8, 256], strides = [1, 1]} : vector<64x256xf32> to vector<8x256xf32>
    %271 = arith.addf %269, %270 : vector<8x256xf32>
    %272 = arith.negf %271 : vector<8x256xf32>
    %273 = math.exp %272 : vector<8x256xf32>
    %cst_44 = arith.constant 1.000000e+00 : f32
    %274 = vector.broadcast %cst_44 : f32 to vector<8x256xf32>
    %275 = arith.addf %274, %273 : vector<8x256xf32>
    %276 = arith.divf %274, %275 : vector<8x256xf32>
    %277 = math.tanh %271 : vector<8x256xf32>
    %278 = arith.select %5, %277, %276 : vector<8x256xi1>, vector<8x256xf32>
    %279 = vector.extract_strided_slice %278 {offsets = [0, 0], sizes = [8, 64], strides = [1, 1]} : vector<8x256xf32> to vector<8x64xf32>
    %280 = vector.extract_strided_slice %278 {offsets = [0, 64], sizes = [8, 64], strides = [1, 1]} : vector<8x256xf32> to vector<8x64xf32>
    %281 = vector.extract_strided_slice %278 {offsets = [0, 128], sizes = [8, 64], strides = [1, 1]} : vector<8x256xf32> to vector<8x64xf32>
    %282 = vector.extract_strided_slice %278 {offsets = [0, 192], sizes = [8, 64], strides = [1, 1]} : vector<8x256xf32> to vector<8x64xf32>
    %283 = arith.mulf %280, %265 : vector<8x64xf32>
    %284 = arith.mulf %279, %281 : vector<8x64xf32>
    %285 = arith.addf %283, %284 : vector<8x64xf32>
    %286 = math.tanh %285 : vector<8x64xf32>
    %287 = arith.mulf %282, %286 : vector<8x64xf32>
    %288 = arith.truncf %287 : vector<8x64xf32> to vector<8x64xbf16>
    %cst_45 = arith.constant dense<0.000000e+00> : vector<8x256xf32>
    %289 = tpu.matmul %288, %185, %cst_45 {dimension_numbers = #tpu.dot_dimension_numbers<[1], [0], [0], [1], [0, 0, 1, 1], [], []>} : vector<8x64xbf16>, vector<64x256xbf16>, vector<8x256xf32> -> vector<8x256xf32>
    %290 = vector.extract_strided_slice %184 {offsets = [40, 0], sizes = [8, 256], strides = [1, 1]} : vector<64x256xf32> to vector<8x256xf32>
    %291 = arith.addf %289, %290 : vector<8x256xf32>
    %292 = arith.negf %291 : vector<8x256xf32>
    %293 = math.exp %292 : vector<8x256xf32>
    %cst_46 = arith.constant 1.000000e+00 : f32
    %294 = vector.broadcast %cst_46 : f32 to vector<8x256xf32>
    %295 = arith.addf %294, %293 : vector<8x256xf32>
    %296 = arith.divf %294, %295 : vector<8x256xf32>
    %297 = math.tanh %291 : vector<8x256xf32>
    %298 = arith.select %5, %297, %296 : vector<8x256xi1>, vector<8x256xf32>
    %299 = vector.extract_strided_slice %298 {offsets = [0, 0], sizes = [8, 64], strides = [1, 1]} : vector<8x256xf32> to vector<8x64xf32>
    %300 = vector.extract_strided_slice %298 {offsets = [0, 64], sizes = [8, 64], strides = [1, 1]} : vector<8x256xf32> to vector<8x64xf32>
    %301 = vector.extract_strided_slice %298 {offsets = [0, 128], sizes = [8, 64], strides = [1, 1]} : vector<8x256xf32> to vector<8x64xf32>
    %302 = vector.extract_strided_slice %298 {offsets = [0, 192], sizes = [8, 64], strides = [1, 1]} : vector<8x256xf32> to vector<8x64xf32>
    %303 = arith.mulf %300, %285 : vector<8x64xf32>
    %304 = arith.mulf %299, %301 : vector<8x64xf32>
    %305 = arith.addf %303, %304 : vector<8x64xf32>
    %306 = math.tanh %305 : vector<8x64xf32>
    %307 = arith.mulf %302, %306 : vector<8x64xf32>
    %308 = arith.truncf %307 : vector<8x64xf32> to vector<8x64xbf16>
    %cst_47 = arith.constant dense<0.000000e+00> : vector<8x256xf32>
    %309 = tpu.matmul %308, %185, %cst_47 {dimension_numbers = #tpu.dot_dimension_numbers<[1], [0], [0], [1], [0, 0, 1, 1], [], []>} : vector<8x64xbf16>, vector<64x256xbf16>, vector<8x256xf32> -> vector<8x256xf32>
    %310 = vector.extract_strided_slice %184 {offsets = [48, 0], sizes = [8, 256], strides = [1, 1]} : vector<64x256xf32> to vector<8x256xf32>
    %311 = arith.addf %309, %310 : vector<8x256xf32>
    %312 = arith.negf %311 : vector<8x256xf32>
    %313 = math.exp %312 : vector<8x256xf32>
    %cst_48 = arith.constant 1.000000e+00 : f32
    %314 = vector.broadcast %cst_48 : f32 to vector<8x256xf32>
    %315 = arith.addf %314, %313 : vector<8x256xf32>
    %316 = arith.divf %314, %315 : vector<8x256xf32>
    %317 = math.tanh %311 : vector<8x256xf32>
    %318 = arith.select %5, %317, %316 : vector<8x256xi1>, vector<8x256xf32>
    %319 = vector.extract_strided_slice %318 {offsets = [0, 0], sizes = [8, 64], strides = [1, 1]} : vector<8x256xf32> to vector<8x64xf32>
    %320 = vector.extract_strided_slice %318 {offsets = [0, 64], sizes = [8, 64], strides = [1, 1]} : vector<8x256xf32> to vector<8x64xf32>
    %321 = vector.extract_strided_slice %318 {offsets = [0, 128], sizes = [8, 64], strides = [1, 1]} : vector<8x256xf32> to vector<8x64xf32>
    %322 = vector.extract_strided_slice %318 {offsets = [0, 192], sizes = [8, 64], strides = [1, 1]} : vector<8x256xf32> to vector<8x64xf32>
    %323 = arith.mulf %320, %305 : vector<8x64xf32>
    %324 = arith.mulf %319, %321 : vector<8x64xf32>
    %325 = arith.addf %323, %324 : vector<8x64xf32>
    %326 = math.tanh %325 : vector<8x64xf32>
    %327 = arith.mulf %322, %326 : vector<8x64xf32>
    %328 = arith.truncf %327 : vector<8x64xf32> to vector<8x64xbf16>
    %cst_49 = arith.constant dense<0.000000e+00> : vector<8x256xf32>
    %329 = tpu.matmul %328, %185, %cst_49 {dimension_numbers = #tpu.dot_dimension_numbers<[1], [0], [0], [1], [0, 0, 1, 1], [], []>} : vector<8x64xbf16>, vector<64x256xbf16>, vector<8x256xf32> -> vector<8x256xf32>
    %330 = vector.extract_strided_slice %184 {offsets = [56, 0], sizes = [8, 256], strides = [1, 1]} : vector<64x256xf32> to vector<8x256xf32>
    %331 = arith.addf %329, %330 : vector<8x256xf32>
    %332 = arith.negf %331 : vector<8x256xf32>
    %333 = math.exp %332 : vector<8x256xf32>
    %cst_50 = arith.constant 1.000000e+00 : f32
    %334 = vector.broadcast %cst_50 : f32 to vector<8x256xf32>
    %335 = arith.addf %334, %333 : vector<8x256xf32>
    %336 = arith.divf %334, %335 : vector<8x256xf32>
    %337 = math.tanh %331 : vector<8x256xf32>
    %338 = arith.select %5, %337, %336 : vector<8x256xi1>, vector<8x256xf32>
    %339 = vector.extract_strided_slice %338 {offsets = [0, 0], sizes = [8, 64], strides = [1, 1]} : vector<8x256xf32> to vector<8x64xf32>
    %340 = vector.extract_strided_slice %338 {offsets = [0, 64], sizes = [8, 64], strides = [1, 1]} : vector<8x256xf32> to vector<8x64xf32>
    %341 = vector.extract_strided_slice %338 {offsets = [0, 128], sizes = [8, 64], strides = [1, 1]} : vector<8x256xf32> to vector<8x64xf32>
    %342 = vector.extract_strided_slice %338 {offsets = [0, 192], sizes = [8, 64], strides = [1, 1]} : vector<8x256xf32> to vector<8x64xf32>
    %343 = arith.mulf %340, %325 : vector<8x64xf32>
    %344 = arith.mulf %339, %341 : vector<8x64xf32>
    %345 = arith.addf %343, %344 : vector<8x64xf32>
    %346 = math.tanh %345 : vector<8x64xf32>
    %347 = arith.mulf %342, %346 : vector<8x64xf32>
    %348 = vector.extract_strided_slice %347 {offsets = [0, 0], sizes = [8, 32], strides = [1, 1]} : vector<8x64xf32> to vector<8x32xf32>
    %349 = vector.extract_strided_slice %207 {offsets = [0, 32], sizes = [8, 32], strides = [1, 1]} : vector<8x64xf32> to vector<8x32xf32>
    %c0_51 = arith.constant 0 : index
    %c0_52 = arith.constant 0 : index
    %c0_53 = arith.constant 0 : index
    %350 = vector.load %arg2[%c0_51, %c0_52, %c0_53] : memref<1x8x16xf32, #tpu.memory_space<vmem>>, vector<1x8x16xf32>
    %351 = vector.shape_cast %350 : vector<1x8x16xf32> to vector<8x16xf32>
    %352 = tpu.concatenate %351, %348, %349 in 1 : vector<8x16xf32>, vector<8x32xf32>, vector<8x32xf32> -> vector<8x80xf32>
    %353 = arith.truncf %352 : vector<8x80xf32> to vector<8x80xbf16>
    %c0_54 = arith.constant 0 : index
    %c0_55 = arith.constant 0 : index
    %354 = vector.load %arg9[%c0_54, %c0_55] : memref<80x64xbf16, #tpu.memory_space<vmem>>, vector<80x64xbf16>
    %cst_56 = arith.constant dense<0.000000e+00> : vector<8x64xf32>
    %355 = tpu.matmul %353, %354, %cst_56 {dimension_numbers = #tpu.dot_dimension_numbers<[1], [0], [0], [1], [0, 0, 1, 1], [], []>} : vector<8x80xbf16>, vector<80x64xbf16>, vector<8x64xf32> -> vector<8x64xf32>
    %c0_57 = arith.constant 0 : index
    %c0_58 = arith.constant 0 : index
    %356 = vector.load %arg10[%c0_57, %c0_58] : memref<1x64xf32, #tpu.memory_space<vmem>>, vector<1x64xf32>
    %357 = vector.broadcast %356 : vector<1x64xf32> to vector<8x64xf32>
    %358 = arith.addf %355, %357 : vector<8x64xf32>
    %cst_59 = arith.constant 0.000000e+00 : f32
    %359 = vector.broadcast %cst_59 : f32 to vector<8x64xf32>
    %360 = arith.maximumf %358, %359 : vector<8x64xf32>
    %361 = arith.truncf %360 : vector<8x64xf32> to vector<8x64xbf16>
    %c0_60 = arith.constant 0 : index
    %c0_61 = arith.constant 0 : index
    %362 = vector.load %arg11[%c0_60, %c0_61] : memref<64x32xbf16, #tpu.memory_space<vmem>>, vector<64x32xbf16>
    %cst_62 = arith.constant dense<0.000000e+00> : vector<8x32xf32>
    %363 = tpu.matmul %361, %362, %cst_62 {dimension_numbers = #tpu.dot_dimension_numbers<[1], [0], [0], [1], [0, 0, 1, 1], [], []>} : vector<8x64xbf16>, vector<64x32xbf16>, vector<8x32xf32> -> vector<8x32xf32>
    %c0_63 = arith.constant 0 : index
    %c0_64 = arith.constant 0 : index
    %364 = vector.load %arg12[%c0_63, %c0_64] : memref<1x32xf32, #tpu.memory_space<vmem>>, vector<1x32xf32>
    %365 = vector.broadcast %364 : vector<1x32xf32> to vector<8x32xf32>
    %366 = arith.addf %363, %365 : vector<8x32xf32>
    %cst_65 = arith.constant 0.000000e+00 : f32
    %367 = vector.broadcast %cst_65 : f32 to vector<8x32xf32>
    %368 = arith.maximumf %366, %367 : vector<8x32xf32>
    %369 = arith.truncf %368 : vector<8x32xf32> to vector<8x32xbf16>
    %c0_66 = arith.constant 0 : index
    %c0_67 = arith.constant 0 : index
    %370 = vector.load %arg13[%c0_66, %c0_67] : memref<32x1xbf16, #tpu.memory_space<vmem>>, vector<32x1xbf16>
    %cst_68 = arith.constant dense<0.000000e+00> : vector<8x1xf32>
    %371 = tpu.matmul %369, %370, %cst_68 {dimension_numbers = #tpu.dot_dimension_numbers<[1], [0], [0], [1], [0, 0, 1, 1], [], []>} : vector<8x32xbf16>, vector<32x1xbf16>, vector<8x1xf32> -> vector<8x1xf32>
    %c0_69 = arith.constant 0 : index
    %c0_70 = arith.constant 0 : index
    %372 = vector.load %arg14[%c0_69, %c0_70] : memref<1x1xf32, #tpu.memory_space<vmem>>, vector<1x1xf32>
    %373 = vector.broadcast %372 : vector<1x1xf32> to vector<8x1xf32>
    %374 = arith.addf %371, %373 : vector<8x1xf32>
    %cst_71 = arith.constant 0.000000e+00 : f32
    %cst_72 = arith.constant 1.000000e+00 : f32
    %375 = vector.broadcast %cst_71 : f32 to vector<8x1xf32>
    %376 = arith.maximumf %375, %374 : vector<8x1xf32>
    %377 = vector.broadcast %cst_72 : f32 to vector<8x1xf32>
    %378 = arith.minimumf %377, %376 : vector<8x1xf32>
    %c0_73 = arith.constant 0 : index
    %c0_74 = arith.constant 0 : index
    %c0_75 = arith.constant 0 : index
    %379 = vector.load %arg15[%c0_73, %c0_74, %c0_75] : memref<1x8x1xf32, #tpu.memory_space<vmem>>, vector<1x8x1xf32>
    %380 = vector.shape_cast %379 : vector<1x8x1xf32> to vector<8x1xf32>
    %381 = vector.shape_cast %378 : vector<8x1xf32> to vector<1x8x1xf32>
    tpu.vector_store %arg15[%c0_73, %c0_74, %c0_75], %381 {strides = array<i32>} : memref<1x8x1xf32, #tpu.memory_space<vmem>>, vector<1x8x1xf32>,
    return
  }
  func.func @transform_0(%arg0: i32) -> (i32, i32, i32) {
    %c0_i32 = arith.constant 0 : i32
    %c0_i32_0 = arith.constant 0 : i32
    %c0_i32_1 = arith.constant 0 : i32
    return %arg0, %c0_i32, %c0_i32_0 : i32, i32, i32
  }
  func.func @transform_1(%arg0: i32) -> (i32, i32, i32) {
    %c0_i32 = arith.constant 0 : i32
    %c0_i32_0 = arith.constant 0 : i32
    %c0_i32_1 = arith.constant 0 : i32
    return %arg0, %c0_i32, %c0_i32_0 : i32, i32, i32
  }
  func.func @transform_2(%arg0: i32) -> (i32, i32) {
    %c0_i32 = arith.constant 0 : i32
    %c0_i32_0 = arith.constant 0 : i32
    %c0_i32_1 = arith.constant 0 : i32
    return %c0_i32, %c0_i32_0 : i32, i32
  }
  func.func @transform_3(%arg0: i32) -> (i32, i32) {
    %c0_i32 = arith.constant 0 : i32
    %c0_i32_0 = arith.constant 0 : i32
    %c0_i32_1 = arith.constant 0 : i32
    return %c0_i32, %c0_i32_0 : i32, i32
  }
  func.func @transform_4(%arg0: i32) -> (i32, i32) {
    %c0_i32 = arith.constant 0 : i32
    %c0_i32_0 = arith.constant 0 : i32
    %c0_i32_1 = arith.constant 0 : i32
    return %c0_i32, %c0_i32_0 : i32, i32
  }
  func.func @transform_5(%arg0: i32) -> (i32, i32) {
    %c0_i32 = arith.constant 0 : i32
    %c0_i32_0 = arith.constant 0 : i32
    %c0_i32_1 = arith.constant 0 : i32
    return %c0_i32, %c0_i32_0 : i32, i32
  }
  func.func @transform_6(%arg0: i32) -> (i32, i32) {
    %c0_i32 = arith.constant 0 : i32
    %c0_i32_0 = arith.constant 0 : i32
    %c0_i32_1 = arith.constant 0 : i32
    return %c0_i32, %c0_i32_0 : i32, i32
  }
  func.func @transform_7(%arg0: i32) -> (i32, i32) {
    %c0_i32 = arith.constant 0 : i32
    %c0_i32_0 = arith.constant 0 : i32
    %c0_i32_1 = arith.constant 0 : i32
    return %c0_i32, %c0_i32_0 : i32, i32
  }
  func.func @transform_8(%arg0: i32) -> (i32, i32) {
    %c0_i32 = arith.constant 0 : i32
    %c0_i32_0 = arith.constant 0 : i32
    %c0_i32_1 = arith.constant 0 : i32
    return %c0_i32, %c0_i32_0 : i32, i32
  }
  func.func @transform_9(%arg0: i32) -> (i32, i32) {
    %c0_i32 = arith.constant 0 : i32
    %c0_i32_0 = arith.constant 0 : i32
    %c0_i32_1 = arith.constant 0 : i32
    return %c0_i32, %c0_i32_0 : i32, i32
  }
  func.func @transform_10(%arg0: i32) -> (i32, i32) {
    %c0_i32 = arith.constant 0 : i32
    %c0_i32_0 = arith.constant 0 : i32
    %c0_i32_1 = arith.constant 0 : i32
    return %c0_i32, %c0_i32_0 : i32, i32
  }
  func.func @transform_11(%arg0: i32) -> (i32, i32) {
    %c0_i32 = arith.constant 0 : i32
    %c0_i32_0 = arith.constant 0 : i32
    %c0_i32_1 = arith.constant 0 : i32
    return %c0_i32, %c0_i32_0 : i32, i32
  }
  func.func @transform_12(%arg0: i32) -> (i32, i32) {
    %c0_i32 = arith.constant 0 : i32
    %c0_i32_0 = arith.constant 0 : i32
    %c0_i32_1 = arith.constant 0 : i32
    return %c0_i32, %c0_i32_0 : i32, i32
  }
  func.func @transform_13(%arg0: i32) -> (i32, i32) {
    %c0_i32 = arith.constant 0 : i32
    %c0_i32_0 = arith.constant 0 : i32
    %c0_i32_1 = arith.constant 0 : i32
    return %c0_i32, %c0_i32_0 : i32, i32
  }
  func.func @transform_14(%arg0: i32) -> (i32, i32, i32) {
    %c0_i32 = arith.constant 0 : i32
    %c0_i32_0 = arith.constant 0 : i32
    %c0_i32_1 = arith.constant 0 : i32
    return %arg0, %c0_i32, %c0_i32_0 : i32, i32, i32
  }
}

</mosaic_0001>

<llo_original>
// kernel: tpu_custom_call.1
$region0: #{tpu_custom_call.1}
  #allocation0 [shape = 'u32[]', space=smem, size = 0x4, offset = 0x4, fixed_abs, tag = 'smem constant byte address 0x4 - core index']
  #allocation1 [shape = 'u32[144,128]{1,0:T(1,128)}', space=vmem, size = 0x12000, scoped, tag = 'internal scratch']
  #allocation2 [shape = 'f32[1,1]{1,0:T(1,128)S(1)}', space=vmem, size = 0x200, scoped, tag = 'scoped memory for tpu_custom_call.1']
  %s0 = inlined_call_operand.hbm [shape: bf16[1,64,64], index: 0, kind: input, shape index: {}]
  %s1 = inlined_call_operand.hbm [shape: f32[1,8,16], index: 1, kind: input, shape index: {}]
  %s2 = inlined_call_operand.hbm [shape: bf16[64,256], index: 2, kind: input, shape index: {}]
  %s3 = inlined_call_operand.hbm [shape: bf16[64,256], index: 3, kind: input, shape index: {}]
  %s4 = inlined_call_operand.vmem [shape: f32[1,256], index: 4, kind: input, shape index: {}]
  %s5 = inlined_call_operand.vmem [shape: bf16[128,256], index: 5, kind: input, shape index: {}]
  %s6 = inlined_call_operand.hbm [shape: bf16[64,256], index: 6, kind: input, shape index: {}]
  %s7 = inlined_call_operand.vmem [shape: f32[1,256], index: 7, kind: input, shape index: {}]
  %s8 = inlined_call_operand.vmem [shape: bf16[80,64], index: 8, kind: input, shape index: {}]
  %s9 = inlined_call_operand.vmem [shape: f32[1,64], index: 9, kind: input, shape index: {}]
  %s10 = inlined_call_operand.vmem [shape: bf16[64,32], index: 10, kind: input, shape index: {}]
  %s11 = inlined_call_operand.vmem [shape: f32[1,32], index: 11, kind: input, shape index: {}]
  %s12 = inlined_call_operand.vmem [shape: bf16[32,1], index: 12, kind: input, shape index: {}]
  %s13 = inlined_call_operand.<no memory space> [shape: f32[1,1], index: 13, kind: input, shape index: {}]
  %s14 = inlined_call_operand.vmem [shape: f32[1,8,1], index: 14, kind: output, shape index: {}]
  %s15 = sld [smem:[#allocation0]]
  $region86: #{tpu_custom_call.1} parent=0
    _
  %s17 = ssub.s32 1, %s15
  %s18 = scalar_select 0, %s17, %s15
  %v19 = vstv %s13
  %20 = vst [vmem:[#allocation2] sm:$0x1] %v19
  $region1: #{tpu_custom_call.1} parent=0
    #allocation3 [shape = 'u8[16384]{0}', space=vmem, size = 0x4000, scoped, tag = 'input window, operand 0, single buffered']
    #allocation4 [shape = 's32[1]{0}', space=sflag, size = 0x4, scoped, tag = 'scoped memory for tpu_custom_call.1']
    #allocation5 [shape = 'u8[4096]{0}', space=vmem, size = 0x1000, scoped, tag = 'input window, operand 1, single buffered']
    #allocation6 [shape = 's32[1]{0}', space=sflag, size = 0x4, scoped, tag = 'scoped memory for tpu_custom_call.1']
    #allocation7 [shape = 'u8[32768]{0}', space=vmem, size = 0x8000, scoped, tag = 'input window, operand 2, single buffered']
    #allocation8 [shape = 'u8[32768]{0}', space=vmem, size = 0x8000, scoped, tag = 'input window, operand 3, single buffered']
    #allocation9 [shape = 's32[1]{0}', space=sflag, size = 0x4, scoped, tag = 'scoped memory for tpu_custom_call.1']
    #allocation10 [shape = 'u8[32768]{0}', space=vmem, size = 0x8000, scoped, tag = 'input window, operand 6, single buffered']
    %21 = vsyncpa [#allocation4], 0
    %22 = vsyncpa [#allocation6], 0
    %23 = vsyncpa [#allocation9], 0
    // Predicated region
    $region2: #{tpu_custom_call.1} parent=1 // pred_check
      _
    $region3: #{tpu_custom_call.1} parent=1 // pred_check_branch
      %25 = sbr.rel (0) target = $region5
    $region4: #{tpu_custom_call.1} parent=1 // pred_region
      %s27 = ssub.s32 512, 512
      %28 = vsyncadd [#allocation4], %s27
      %s29 = sshll.u32 [#allocation3], 4
      %s30 = int_to_ptr.vmem [resolvable:$true] %s29
      %35 = dma.hbm_to_vmem [thread:$0]  %s0, 512, %s30, [#allocation4], 64, 64, 4
    $region5: #{tpu_custom_call.1} parent=1 // pred_fallthru
      _
    // Predicated region
    $region6: #{tpu_custom_call.1} parent=1 // pred_check
      _
    $region7: #{tpu_custom_call.1} parent=1 // pred_check_branch
      %37 = sbr.rel (0) target = $region9
    $region8: #{tpu_custom_call.1} parent=1 // pred_region
      %s39 = ssub.s32 128, 128
      %40 = vsyncadd [#allocation6], %s39
      %s42 = sshll.u32 [#allocation5], 4
      %s43 = int_to_ptr.vmem [resolvable:$true] %s42
      %45 = dma.hbm_to_vmem [thread:$0]  %s1, 128, %s43, [#allocation6]
    $region9: #{tpu_custom_call.1} parent=1 // pred_fallthru
      _
    // Predicated region
    $region10: #{tpu_custom_call.1} parent=1 // pred_check
      _
    $region11: #{tpu_custom_call.1} parent=1 // pred_check_branch
      %47 = sbr.rel (0) target = $region13
    $region12: #{tpu_custom_call.1} parent=1 // pred_region
      %s49 = ssub.s32 1024, 1024
      %50 = vsyncadd [#allocation6], %s49
      %s51 = sshll.u32 [#allocation7], 4
      %s52 = int_to_ptr.vmem [resolvable:$true] %s51
      %57 = dma.hbm_to_vmem [thread:$0]  %s2, 1024, %s52, [#allocation6], 128, 128, 8
    $region13: #{tpu_custom_call.1} parent=1 // pred_fallthru
      _
    // Predicated region
    $region14: #{tpu_custom_call.1} parent=1 // pred_check
      _
    $region15: #{tpu_custom_call.1} parent=1 // pred_check_branch
      %59 = sbr.rel (0) target = $region17
    $region16: #{tpu_custom_call.1} parent=1 // pred_region
      %s61 = ssub.s32 1024, 1024
      %62 = vsyncadd [#allocation9], %s61
      %s63 = sshll.u32 [#allocation8], 4
      %s64 = int_to_ptr.vmem [resolvable:$true] %s63
      %69 = dma.hbm_to_vmem [thread:$0]  %s3, 1024, %s64, [#allocation9], 128, 128, 8
    $region17: #{tpu_custom_call.1} parent=1 // pred_fallthru
      _
    // Predicated region
    $region18: #{tpu_custom_call.1} parent=1 // pred_check
      _
    $region19: #{tpu_custom_call.1} parent=1 // pred_check_branch
      %71 = sbr.rel (0) target = $region21
    $region20: #{tpu_custom_call.1} parent=1 // pred_region
      _
    $region21: #{tpu_custom_call.1} parent=1 // pred_fallthru
      _
    // Predicated region
    $region22: #{tpu_custom_call.1} parent=1 // pred_check
      _
    $region23: #{tpu_custom_call.1} parent=1 // pred_check_branch
      %73 = sbr.rel (0) target = $region25
    $region24: #{tpu_custom_call.1} parent=1 // pred_region
      _
    $region25: #{tpu_custom_call.1} parent=1 // pred_fallthru
      _
    // Predicated region
    $region26: #{tpu_custom_call.1} parent=1 // pred_check
      _
    $region27: #{tpu_custom_call.1} parent=1 // pred_check_branch
      %75 = sbr.rel (0) target = $region29
    $region28: #{tpu_custom_call.1} parent=1 // pred_region
      %s77 = ssub.s32 1024, 1024
      %78 = vsyncadd [#allocation9], %s77
      %s79 = sshll.u32 [#allocation10], 4
      %s80 = int_to_ptr.vmem [resolvable:$true] %s79
      %85 = dma.hbm_to_vmem [thread:$0]  %s6, 1024, %s80, [#allocation9], 128, 128, 8
    $region29: #{tpu_custom_call.1} parent=1 // pred_fallthru
      _
    // Predicated region
    $region30: #{tpu_custom_call.1} parent=1 // pred_check
      _
    $region31: #{tpu_custom_call.1} parent=1 // pred_check_branch
      %87 = sbr.rel (0) target = $region33
    $region32: #{tpu_custom_call.1} parent=1 // pred_region
      _
    $region33: #{tpu_custom_call.1} parent=1 // pred_fallthru
      _
    // Predicated region
    $region34: #{tpu_custom_call.1} parent=1 // pred_check
      _
    $region35: #{tpu_custom_call.1} parent=1 // pred_check_branch
      %89 = sbr.rel (0) target = $region37
    $region36: #{tpu_custom_call.1} parent=1 // pred_region
      _
    $region37: #{tpu_custom_call.1} parent=1 // pred_fallthru
      _
    // Predicated region
    $region38: #{tpu_custom_call.1} parent=1 // pred_check
      _
    $region39: #{tpu_custom_call.1} parent=1 // pred_check_branch
      %91 = sbr.rel (0) target = $region41
    $region40: #{tpu_custom_call.1} parent=1 // pred_region
      _
    $region41: #{tpu_custom_call.1} parent=1 // pred_fallthru
      _
    // Predicated region
    $region42: #{tpu_custom_call.1} parent=1 // pred_check
      _
    $region43: #{tpu_custom_call.1} parent=1 // pred_check_branch
      %93 = sbr.rel (0) target = $region45
    $region44: #{tpu_custom_call.1} parent=1 // pred_region
      _
    $region45: #{tpu_custom_call.1} parent=1 // pred_fallthru
      _
    // Predicated region
    $region46: #{tpu_custom_call.1} parent=1 // pred_check
      _
    $region47: #{tpu_custom_call.1} parent=1 // pred_check_branch
      %95 = sbr.rel (0) target = $region49
    $region48: #{tpu_custom_call.1} parent=1 // pred_region
      _
    $region49: #{tpu_custom_call.1} parent=1 // pred_fallthru
      _
    // Predicated region
    $region50: #{tpu_custom_call.1} parent=1 // pred_check
      _
    $region51: #{tpu_custom_call.1} parent=1 // pred_check_branch
      %97 = sbr.rel (0) target = $region53
    $region52: #{tpu_custom_call.1} parent=1 // pred_region
      _
    $region53: #{tpu_custom_call.1} parent=1 // pred_fallthru
      _
    // Predicated region
    $region54: #{tpu_custom_call.1} parent=1 // pred_check
      _
    $region55: #{tpu_custom_call.1} parent=1 // pred_check_branch
      %99 = sbr.rel (0) target = $region57
    $region56: #{tpu_custom_call.1} parent=1 // pred_region
      _
    $region57: #{tpu_custom_call.1} parent=1 // pred_fallthru
      _
    // Predicated region
    $region58: #{tpu_custom_call.1} parent=1 // pred_check
      _
    $region59: #{tpu_custom_call.1} parent=1 // pred_check_branch
      %101 = sbr.rel (0) target = $region61
    $region60: #{tpu_custom_call.1} parent=1 // pred_region
      %102 = dma.done [#allocation4], 512
    $region61: #{tpu_custom_call.1} parent=1 // pred_fallthru
      _
    // Predicated region
    $region62: #{tpu_custom_call.1} parent=1 // pred_check
      _
    $region63: #{tpu_custom_call.1} parent=1 // pred_check_branch
      %104 = sbr.rel (0) target = $region65
    $region64: #{tpu_custom_call.1} parent=1 // pred_region
      %105 = dma.done [#allocation6], 128
    $region65: #{tpu_custom_call.1} parent=1 // pred_fallthru
      _
    // Predicated region
    $region66: #{tpu_custom_call.1} parent=1 // pred_check
      _
    $region67: #{tpu_custom_call.1} parent=1 // pred_check_branch
      %107 = sbr.rel (0) target = $region69
    $region68: #{tpu_custom_call.1} parent=1 // pred_region
      %108 = dma.done [#allocation6], 1024
    $region69: #{tpu_custom_call.1} parent=1 // pred_fallthru
      _
    // Predicated region
    $region70: #{tpu_custom_call.1} parent=1 // pred_check
      _
    $region71: #{tpu_custom_call.1} parent=1 // pred_check_branch
      %110 = sbr.rel (0) target = $region73
    $region72: #{tpu_custom_call.1} parent=1 // pred_region
      %111 = dma.done [#allocation9], 1024
    $region73: #{tpu_custom_call.1} parent=1 // pred_fallthru
      _
    // Predicated region
    $region74: #{tpu_custom_call.1} parent=1 // pred_check
      _
    $region75: #{tpu_custom_call.1} parent=1 // pred_check_branch
      %113 = sbr.rel (0) target = $region77
    $region76: #{tpu_custom_call.1} parent=1 // pred_region
      %114 = dma.done [#allocation9], 1024
    $region77: #{tpu_custom_call.1} parent=1 // pred_fallthru
      _
    %v116 = vlaneseq
    %v117 = vand.u32 %v116, 127
    %v118 = vadd.s32 %v117, 128
    %vm119 = vcmp.ge.s32.totalorder %v117, 128
    %vm120 = vcmp.ge.s32.totalorder %v118, 128
    %vm121 = vcmp.lt.s32.totalorder %v117, 192
    %vm122 = vcmp.lt.s32.totalorder %v118, 192
    %vm123 = vmand %vm119, %vm121
    %vm124 = vmand %vm120, %vm122
    %v125 = vld [vmem:[#allocation3] sm:$0xf]
    %v126 = vld [vmem:[#allocation3 + $0x4] sm:$0xf]
    %v127 = vld [vmem:[#allocation3 + $0x8] sm:$0xf]
    %v128 = vld [vmem:[#allocation3 + $0xc] sm:$0xf]
    %v129 = vld [vmem:[#allocation3 + $0x10] sm:$0xf]
    %v130 = vld [vmem:[#allocation3 + $0x14] sm:$0xf]
    %v131 = vld [vmem:[#allocation3 + $0x18] sm:$0xf]
    %v132 = vld [vmem:[#allocation3 + $0x1c] sm:$0xf]
    %v133 = vld [vmem:[#allocation7] sm:$0xff]
    %v134 = vld [vmem:[#allocation7 + $0x8] sm:$0xff]
    %v135 = vld [vmem:[#allocation7 + $0x10] sm:$0xff]
    %v136 = vld [vmem:[#allocation7 + $0x18] sm:$0xff]
    %v137 = vld [vmem:[#allocation7 + $0x20] sm:$0xff]
    %v138 = vld [vmem:[#allocation7 + $0x28] sm:$0xff]
    %v139 = vld [vmem:[#allocation7 + $0x30] sm:$0xff]
    %v140 = vld [vmem:[#allocation7 + $0x38] sm:$0xff]
    %v141 = vld [vmem:[%s4] sm:$0x3]
    %v143 = vlaneseq
    %v144 = vshrl.u32 %v143, 7
    %v145 = vsub.s32 0, %v144
    %v146 = vrot.slane %v141, %v145
    %v147 = vlaneseq
    %v148 = vshrl.u32 %v147, 7
    %v149 = vsub.s32 1, %v148
    %v150 = vrot.slane %v141, %v149
    %v161 = vunpack.c.l.b16 %v125
    %v162 = vunpack.c.l.b16 %v126
    %v163 = vunpack.c.l.b16 %v127
    %v164 = vunpack.c.l.b16 %v128
    %v165 = vunpack.c.l.b16 %v129
    %v166 = vunpack.c.l.b16 %v130
    %v167 = vunpack.c.l.b16 %v131
    %v168 = vunpack.c.l.b16 %v132
    %v169 = vpack.c.b16 %v162, %v161
    %v170 = vpack.c.b16 %v164, %v163
    %v171 = vpack.c.b16 %v166, %v165
    %v172 = vpack.c.b16 %v168, %v167
    %v181 = vunpack.c.l.b16 %v133
    %v182 = vunpack.c.h.b16 %v133
    %v183 = vunpack.c.l.b16 %v134
    %v184 = vunpack.c.h.b16 %v134
    %v185 = vunpack.c.l.b16 %v135
    %v186 = vunpack.c.h.b16 %v135
    %v187 = vunpack.c.l.b16 %v136
    %v188 = vunpack.c.h.b16 %v136
    %v189 = vunpack.c.l.b16 %v137
    %v190 = vunpack.c.h.b16 %v137
    %v191 = vunpack.c.l.b16 %v138
    %v192 = vunpack.c.h.b16 %v138
    %v193 = vunpack.c.l.b16 %v139
    %v194 = vunpack.c.h.b16 %v139
    %v195 = vunpack.c.l.b16 %v140
    %v196 = vunpack.c.h.b16 %v140
    %v197 = vpack.c.b16 %v183, %v181
    %v198 = vpack.c.b16 %v184, %v182
    %v199 = vpack.c.b16 %v187, %v185
    %v200 = vpack.c.b16 %v188, %v186
    %v201 = vpack.c.b16 %v191, %v189
    %v202 = vpack.c.b16 %v192, %v190
    %v203 = vpack.c.b16 %v195, %v193
    %v204 = vpack.c.b16 %v196, %v194
    %vm213 = vcmask 523264
    %v215 = vsel %vm213, %v169, 0
    %v218 = vsel %vm213, %v170, 0
    %v221 = vsel %vm213, %v171, 0
    %v224 = vsel %vm213, %v172, 0
    %226 = vmatprep.subr.bf16.mxu0 0
    %227 = vmatpush1.bf16.msra.mxu0 0
    %228 = vmatprep.subr.bf16.mxu0 0
    %229 = vmatpush1.bf16.msra.mxu0 0
    %230 = vmatprep.subr.bf16.mxu0 0
    %231 = vmatpush1.bf16.msra.mxu0 0
    %232 = vmatprep.subr.bf16.mxu0 0
    %233 = vmatpush1.bf16.msra.mxu0 0
    %234 = vmatprep.subr.bf16.mxu0 %v204
    %235 = vmatpush1.bf16.msra.mxu0 %v203
    %236 = vmatprep.subr.bf16.mxu0 %v202
    %237 = vmatpush1.bf16.msra.mxu0 %v201
    %238 = vmatprep.subr.bf16.mxu0 %v200
    %239 = vmatpush1.bf16.msra.mxu0 %v199
    %240 = vmatprep.subr.bf16.mxu0 %v198
    %241 = vmatpush1.bf16.msra.mxu0 %v197
    %242 = vmatprep.subr.bf16.mxu0 0
    %243 = vmatpush2.bf16.msra.mxu0 0
    %244 = vmatprep.subr.bf16.mxu0 0
    %245 = vmatpush2.bf16.msra.mxu0 0
    %246 = vmatprep.subr.bf16.mxu0 0
    %247 = vmatpush2.bf16.msra.mxu0 0
    %248 = vmatprep.subr.bf16.mxu0 0
    %249 = vmatpush2.bf16.msra.mxu0 0
    %250 = vmatprep.subr.bf16.mxu0 0
    %251 = vmatpush2.bf16.msra.mxu0 0
    %252 = vmatprep.subr.bf16.mxu0 0
    %253 = vmatpush2.bf16.msra.mxu0 0
    %254 = vmatprep.subr.bf16.mxu0 0
    %255 = vmatpush2.bf16.msra.mxu0 0
    %256 = vmatprep.subr.bf16.mxu0 0
    %257 = vmatpush2.bf16.msra.mxu0 0
    %258 = vmatprep.mubr.bf16.mxu0 0
    %259 = vmatmul.mubr.bf16.gmra.mxu0 %v215
    %v260 = vpop.f32.mrf.mxu0
    %v261 = vadd.f32 %v146, %v260
    %v262 = vpop.f32.mrf.mxu0
    %v263 = vadd.f32 %v150, %v262
    %v264 = vpop.f32.mrf.mxu0
    %v265 = vadd.f32 %v146, %v264
    %v266 = vpop.f32.mrf.mxu0
    %v267 = vadd.f32 %v150, %v266
    %268 = vmatprep.mubr.bf16.mxu0 0
    %269 = vmatmul.mubr.bf16.gmra.mxu0 %v218
    %v270 = vpop.f32.mrf.mxu0
    %v271 = vadd.f32 %v146, %v270
    %v272 = vpop.f32.mrf.mxu0
    %v273 = vadd.f32 %v150, %v272
    %v274 = vpop.f32.mrf.mxu0
    %v275 = vadd.f32 %v146, %v274
    %v276 = vpop.f32.mrf.mxu0
    %v277 = vadd.f32 %v150, %v276
    %278 = vmatprep.mubr.bf16.mxu0 0
    %279 = vmatmul.mubr.bf16.gmra.mxu0 %v221
    %v280 = vpop.f32.mrf.mxu0
    %v281 = vadd.f32 %v146, %v280
    %v282 = vpop.f32.mrf.mxu0
    %v283 = vadd.f32 %v150, %v282
    %v284 = vpop.f32.mrf.mxu0
    %v285 = vadd.f32 %v146, %v284
    %v286 = vpop.f32.mrf.mxu0
    %v287 = vadd.f32 %v150, %v286
    %288 = vmatprep.mubr.bf16.mxu0 0
    %289 = vmatmul.mubr.bf16.gmra.mxu0 %v224
    %v290 = vpop.f32.mrf.mxu0
    %v291 = vadd.f32 %v146, %v290
    %v292 = vpop.f32.mrf.mxu0
    %v293 = vadd.f32 %v150, %v292
    %v294 = vpop.f32.mrf.mxu0
    %v295 = vadd.f32 %v146, %v294
    %v296 = vpop.f32.mrf.mxu0
    %v297 = vadd.f32 %v150, %v296
    %298 = vdwg.mxu0
    %v299 = vld [vmem:[#allocation8] sm:$0xff]
    %v300 = vld [vmem:[#allocation8 + $0x8] sm:$0xff]
    %v301 = vld [vmem:[#allocation8 + $0x10] sm:$0xff]
    %v302 = vld [vmem:[#allocation8 + $0x18] sm:$0xff]
    %v303 = vld [vmem:[#allocation8 + $0x20] sm:$0xff]
    %v304 = vld [vmem:[#allocation8 + $0x28] sm:$0xff]
    %v305 = vld [vmem:[#allocation8 + $0x30] sm:$0xff]
    %v306 = vld [vmem:[#allocation8 + $0x38] sm:$0xff]
    %v315 = vunpack.c.l.b16 %v299
    %v316 = vunpack.c.h.b16 %v299
    %v317 = vunpack.c.l.b16 %v300
    %v318 = vunpack.c.h.b16 %v300
    %v319 = vunpack.c.l.b16 %v301
    %v320 = vunpack.c.h.b16 %v301
    %v321 = vunpack.c.l.b16 %v302
    %v322 = vunpack.c.h.b16 %v302
    %v323 = vunpack.c.l.b16 %v303
    %v324 = vunpack.c.h.b16 %v303
    %v325 = vunpack.c.l.b16 %v304
    %v326 = vunpack.c.h.b16 %v304
    %v327 = vunpack.c.l.b16 %v305
    %v328 = vunpack.c.h.b16 %v305
    %v329 = vunpack.c.l.b16 %v306
    %v330 = vunpack.c.h.b16 %v306
    %v331 = vpack.c.b16 %v317, %v315
    %v332 = vpack.c.b16 %v318, %v316
    %v333 = vpack.c.b16 %v321, %v319
    %v334 = vpack.c.b16 %v322, %v320
    %v335 = vpack.c.b16 %v325, %v323
    %v336 = vpack.c.b16 %v326, %v324
    %v337 = vpack.c.b16 %v329, %v327
    %v338 = vpack.c.b16 %v330, %v328
    %v348 = vsel %vm213, 0, 0
    %350 = vmatprep.subr.bf16.mxu0 0
    %351 = vmatpush1.bf16.msra.mxu0 0
    %352 = vmatprep.subr.bf16.mxu0 0
    %353 = vmatpush1.bf16.msra.mxu0 0
    %354 = vmatprep.subr.bf16.mxu0 0
    %355 = vmatpush1.bf16.msra.mxu0 0
    %356 = vmatprep.subr.bf16.mxu0 0
    %357 = vmatpush1.bf16.msra.mxu0 0
    %358 = vmatprep.subr.bf16.mxu0 %v338
    %359 = vmatpush1.bf16.msra.mxu0 %v337
    %360 = vmatprep.subr.bf16.mxu0 %v336
    %361 = vmatpush1.bf16.msra.mxu0 %v335
    %362 = vmatprep.subr.bf16.mxu0 %v334
    %363 = vmatpush1.bf16.msra.mxu0 %v333
    %364 = vmatprep.subr.bf16.mxu0 %v332
    %365 = vmatpush1.bf16.msra.mxu0 %v331
    %366 = vmatprep.subr.bf16.mxu0 0
    %367 = vmatpush2.bf16.msra.mxu0 0
    %368 = vmatprep.subr.bf16.mxu0 0
    %369 = vmatpush2.bf16.msra.mxu0 0
    %370 = vmatprep.subr.bf16.mxu0 0
    %371 = vmatpush2.bf16.msra.mxu0 0
    %372 = vmatprep.subr.bf16.mxu0 0
    %373 = vmatpush2.bf16.msra.mxu0 0
    %374 = vmatprep.subr.bf16.mxu0 0
    %375 = vmatpush2.bf16.msra.mxu0 0
    %376 = vmatprep.subr.bf16.mxu0 0
    %377 = vmatpush2.bf16.msra.mxu0 0
    %378 = vmatprep.subr.bf16.mxu0 0
    %379 = vmatpush2.bf16.msra.mxu0 0
    %380 = vmatprep.subr.bf16.mxu0 0
    %381 = vmatpush2.bf16.msra.mxu0 0
    %382 = vmatprep.mubr.bf16.mxu0 0
    %383 = vmatmul.mubr.bf16.gmra.mxu0 %v348
    %v384 = vpop.f32.mrf.mxu0
    %v385 = vadd.f32 %v261, %v384
    %v386 = vpop.f32.mrf.mxu0
    %v387 = vadd.f32 %v263, %v386
    %v388 = vpop.f32.mrf.mxu0
    %v389 = vpop.f32.mrf.mxu0
    %390 = vdwg.mxu0
    %v391 = vxor.u32 %v385, 2147483648
    %v392 = vxor.u32 %v387, 2147483648
    %v393 = vmul.f32 %v391, 1.442695
    %v394 = vpow.pop %v393
    %v395 = vmul.f32 %v392, 1.442695
    %v396 = vpow.pop %v395
    %v397 = vadd.f32 %v394, 1.0
    %v398 = vadd.f32 %v396, 1.0
    %v399 = vrcp.pop %v397
    %v400 = vmul.f32 1.0, %v399
    %v401 = vrcp.pop %v398
    %v402 = vmul.f32 1.0, %v401
    %v403 = vtanh.pop %v385
    %v404 = vtanh.pop %v387
    %v405 = vsel %vm123, %v403, %v400
    %v406 = vsel %vm124, %v404, %v402
    %v407 = vmul.f32 %v405, 0.0
    %v408 = vmul.f32 %v405, %v406
    %410 = vrot.lane.b32.xlu0 %v408, 64
    %v411 = vpop.permute.xlu0 %410
    %v413 = vadd.f32 %v407, %v411
    %v414 = vtanh.pop %v413
    %v415 = vmul.f32 %v406, %v414
    %v416 = vpack.c.bf16 %v415, %v415
    %418 = vrot.lane.b32.xlu0 %v416, 64
    %v419 = vpop.permute.xlu0 %418
    %v421 = vsel %vm213, %v419, 0
    %423 = vmatprep.subr.bf16.mxu0 0
    %424 = vmatpush1.bf16.msra.mxu0 0
    %425 = vmatprep.subr.bf16.mxu0 0
    %426 = vmatpush1.bf16.msra.mxu0 0
    %427 = vmatprep.subr.bf16.mxu0 0
    %428 = vmatpush1.bf16.msra.mxu0 0
    %429 = vmatprep.subr.bf16.mxu0 0
    %430 = vmatpush1.bf16.msra.mxu0 0
    %431 = vmatprep.subr.bf16.mxu0 %v338
    %432 = vmatpush1.bf16.msra.mxu0 %v337
    %433 = vmatprep.subr.bf16.mxu0 %v336
    %434 = vmatpush1.bf16.msra.mxu0 %v335
    %435 = vmatprep.subr.bf16.mxu0 %v334
    %436 = vmatpush1.bf16.msra.mxu0 %v333
    %437 = vmatprep.subr.bf16.mxu0 %v332
    %438 = vmatpush1.bf16.msra.mxu0 %v331
    %439 = vmatprep.subr.bf16.mxu0 0
    %440 = vmatpush2.bf16.msra.mxu0 0
    %441 = vmatprep.subr.bf16.mxu0 0
    %442 = vmatpush2.bf16.msra.mxu0 0
    %443 = vmatprep.subr.bf16.mxu0 0
    %444 = vmatpush2.bf16.msra.mxu0 0
    %445 = vmatprep.subr.bf16.mxu0 0
    %446 = vmatpush2.bf16.msra.mxu0 0
    %447 = vmatprep.subr.bf16.mxu0 0
    %448 = vmatpush2.bf16.msra.mxu0 0
    %449 = vmatprep.subr.bf16.mxu0 0
    %450 = vmatpush2.bf16.msra.mxu0 0
    %451 = vmatprep.subr.bf16.mxu0 0
    %452 = vmatpush2.bf16.msra.mxu0 0
    %453 = vmatprep.subr.bf16.mxu0 0
    %454 = vmatpush2.bf16.msra.mxu0 0
    %455 = vmatprep.mubr.bf16.mxu0 0
    %456 = vmatmul.mubr.bf16.gmra.mxu0 %v421
    %v457 = vpop.f32.mrf.mxu0
    %v458 = vadd.f32 %v265, %v457
    %v459 = vpop.f32.mrf.mxu0
    %v460 = vadd.f32 %v267, %v459
    %v461 = vpop.f32.mrf.mxu0
    %v462 = vpop.f32.mrf.mxu0
    %463 = vdwg.mxu0
    %v464 = vxor.u32 %v458, 2147483648
    %v465 = vxor.u32 %v460, 2147483648
    %v466 = vmul.f32 %v464, 1.442695
    %v467 = vpow.pop %v466
    %v468 = vmul.f32 %v465, 1.442695
    %v469 = vpow.pop %v468
    %v470 = vadd.f32 %v467, 1.0
    %v471 = vadd.f32 %v469, 1.0
    %v472 = vrcp.pop %v470
    %v473 = vmul.f32 1.0, %v472
    %v474 = vrcp.pop %v471
    %v475 = vmul.f32 1.0, %v474
    %v476 = vtanh.pop %v458
    %v477 = vtanh.pop %v460
    %v478 = vsel %vm123, %v476, %v473
    %v479 = vsel %vm124, %v477, %v475
    %v480 = vmul.f32 %v478, %v413
    %v481 = vmul.f32 %v478, %v479
    %483 = vrot.lane.b32.xlu0 %v481, 64
    %v484 = vpop.permute.xlu0 %483
    %v486 = vadd.f32 %v480, %v484
    %v487 = vtanh.pop %v486
    %v488 = vmul.f32 %v479, %v487
    %v489 = vpack.c.bf16 %v488, %v488
    %491 = vrot.lane.b32.xlu0 %v489, 64
    %v492 = vpop.permute.xlu0 %491
    %v494 = vsel %vm213, %v492, 0
    %496 = vmatprep.subr.bf16.mxu0 0
    %497 = vmatpush1.bf16.msra.mxu0 0
    %498 = vmatprep.subr.bf16.mxu0 0
    %499 = vmatpush1.bf16.msra.mxu0 0
    %500 = vmatprep.subr.bf16.mxu0 0
    %501 = vmatpush1.bf16.msra.mxu0 0
    %502 = vmatprep.subr.bf16.mxu0 0
    %503 = vmatpush1.bf16.msra.mxu0 0
    %504 = vmatprep.subr.bf16.mxu0 %v338
    %505 = vmatpush1.bf16.msra.mxu0 %v337
    %506 = vmatprep.subr.bf16.mxu0 %v336
    %507 = vmatpush1.bf16.msra.mxu0 %v335
    %508 = vmatprep.subr.bf16.mxu0 %v334
    %509 = vmatpush1.bf16.msra.mxu0 %v333
    %510 = vmatprep.subr.bf16.mxu0 %v332
    %511 = vmatpush1.bf16.msra.mxu0 %v331
    %512 = vmatprep.subr.bf16.mxu0 0
    %513 = vmatpush2.bf16.msra.mxu0 0
    %514 = vmatprep.subr.bf16.mxu0 0
    %515 = vmatpush2.bf16.msra.mxu0 0
    %516 = vmatprep.subr.bf16.mxu0 0
    %517 = vmatpush2.bf16.msra.mxu0 0
    %518 = vmatprep.subr.bf16.mxu0 0
    %519 = vmatpush2.bf16.msra.mxu0 0
    %520 = vmatprep.subr.bf16.mxu0 0
    %521 = vmatpush2.bf16.msra.mxu0 0
    %522 = vmatprep.subr.bf16.mxu0 0
    %523 = vmatpush2.bf16.msra.mxu0 0
    %524 = vmatprep.subr.bf16.mxu0 0
    %525 = vmatpush2.bf16.msra.mxu0 0
    %526 = vmatprep.subr.bf16.mxu0 0
    %527 = vmatpush2.bf16.msra.mxu0 0
    %528 = vmatprep.mubr.bf16.mxu0 0
    %529 = vmatmul.mubr.bf16.gmra.mxu0 %v494
    %v530 = vpop.f32.mrf.mxu0
    %v531 = vadd.f32 %v271, %v530
    %v532 = vpop.f32.mrf.mxu0
    %v533 = vadd.f32 %v273, %v532
    %v534 = vpop.f32.mrf.mxu0
    %v535 = vpop.f32.mrf.mxu0
    %536 = vdwg.mxu0
    %v537 = vxor.u32 %v531, 2147483648
    %v538 = vxor.u32 %v533, 2147483648
    %v539 = vmul.f32 %v537, 1.442695
    %v540 = vpow.pop %v539
    %v541 = vmul.f32 %v538, 1.442695
    %v542 = vpow.pop %v541
    %v543 = vadd.f32 %v540, 1.0
    %v544 = vadd.f32 %v542, 1.0
    %v545 = vrcp.pop %v543
    %v546 = vmul.f32 1.0, %v545
    %v547 = vrcp.pop %v544
    %v548 = vmul.f32 1.0, %v547
    %v549 = vtanh.pop %v531
    %v550 = vtanh.pop %v533
    %v551 = vsel %vm123, %v549, %v546
    %v552 = vsel %vm124, %v550, %v548
    %v553 = vmul.f32 %v551, %v486
    %v554 = vmul.f32 %v551, %v552
    %556 = vrot.lane.b32.xlu0 %v554, 64
    %v557 = vpop.permute.xlu0 %556
    %v559 = vadd.f32 %v553, %v557
    %v560 = vtanh.pop %v559
    %v561 = vmul.f32 %v552, %v560
    %v562 = vpack.c.bf16 %v561, %v561
    %564 = vrot.lane.b32.xlu0 %v562, 64
    %v565 = vpop.permute.xlu0 %564
    %v567 = vsel %vm213, %v565, 0
    %569 = vmatprep.subr.bf16.mxu0 0
    %570 = vmatpush1.bf16.msra.mxu0 0
    %571 = vmatprep.subr.bf16.mxu0 0
    %572 = vmatpush1.bf16.msra.mxu0 0
    %573 = vmatprep.subr.bf16.mxu0 0
    %574 = vmatpush1.bf16.msra.mxu0 0
    %575 = vmatprep.subr.bf16.mxu0 0
    %576 = vmatpush1.bf16.msra.mxu0 0
    %577 = vmatprep.subr.bf16.mxu0 %v338
    %578 = vmatpush1.bf16.msra.mxu0 %v337
    %579 = vmatprep.subr.bf16.mxu0 %v336
    %580 = vmatpush1.bf16.msra.mxu0 %v335
    %581 = vmatprep.subr.bf16.mxu0 %v334
    %582 = vmatpush1.bf16.msra.mxu0 %v333
    %583 = vmatprep.subr.bf16.mxu0 %v332
    %584 = vmatpush1.bf16.msra.mxu0 %v331
    %585 = vmatprep.subr.bf16.mxu0 0
    %586 = vmatpush2.bf16.msra.mxu0 0
    %587 = vmatprep.subr.bf16.mxu0 0
    %588 = vmatpush2.bf16.msra.mxu0 0
    %589 = vmatprep.subr.bf16.mxu0 0
    %590 = vmatpush2.bf16.msra.mxu0 0
    %591 = vmatprep.subr.bf16.mxu0 0
    %592 = vmatpush2.bf16.msra.mxu0 0
    %593 = vmatprep.subr.bf16.mxu0 0
    %594 = vmatpush2.bf16.msra.mxu0 0
    %595 = vmatprep.subr.bf16.mxu0 0
    %596 = vmatpush2.bf16.msra.mxu0 0
    %597 = vmatprep.subr.bf16.mxu0 0
    %598 = vmatpush2.bf16.msra.mxu0 0
    %599 = vmatprep.subr.bf16.mxu0 0
    %600 = vmatpush2.bf16.msra.mxu0 0
    %601 = vmatprep.mubr.bf16.mxu0 0
    %602 = vmatmul.mubr.bf16.gmra.mxu0 %v567
    %v603 = vpop.f32.mrf.mxu0
    %v604 = vadd.f32 %v275, %v603
    %v605 = vpop.f32.mrf.mxu0
    %v606 = vadd.f32 %v277, %v605
    %v607 = vpop.f32.mrf.mxu0
    %v608 = vpop.f32.mrf.mxu0
    %609 = vdwg.mxu0
    %v610 = vxor.u32 %v604, 2147483648
    %v611 = vxor.u32 %v606, 2147483648
    %v612 = vmul.f32 %v610, 1.442695
    %v613 = vpow.pop %v612
    %v614 = vmul.f32 %v611, 1.442695
    %v615 = vpow.pop %v614
    %v616 = vadd.f32 %v613, 1.0
    %v617 = vadd.f32 %v615, 1.0
    %v618 = vrcp.pop %v616
    %v619 = vmul.f32 1.0, %v618
    %v620 = vrcp.pop %v617
    %v621 = vmul.f32 1.0, %v620
    %v622 = vtanh.pop %v604
    %v623 = vtanh.pop %v606
    %v624 = vsel %vm123, %v622, %v619
    %v625 = vsel %vm124, %v623, %v621
    %v626 = vmul.f32 %v624, %v559
    %v627 = vmul.f32 %v624, %v625
    %629 = vrot.lane.b32.xlu0 %v627, 64
    %v630 = vpop.permute.xlu0 %629
    %v632 = vadd.f32 %v626, %v630
    %v633 = vtanh.pop %v632
    %v634 = vmul.f32 %v625, %v633
    %v635 = vpack.c.bf16 %v634, %v634
    %637 = vrot.lane.b32.xlu0 %v635, 64
    %v638 = vpop.permute.xlu0 %637
    %v640 = vsel %vm213, %v638, 0
    %642 = vmatprep.subr.bf16.mxu0 0
    %643 = vmatpush1.bf16.msra.mxu0 0
    %644 = vmatprep.subr.bf16.mxu0 0
    %645 = vmatpush1.bf16.msra.mxu0 0
    %646 = vmatprep.subr.bf16.mxu0 0
    %647 = vmatpush1.bf16.msra.mxu0 0
    %648 = vmatprep.subr.bf16.mxu0 0
    %649 = vmatpush1.bf16.msra.mxu0 0
    %650 = vmatprep.subr.bf16.mxu0 %v338
    %651 = vmatpush1.bf16.msra.mxu0 %v337
    %652 = vmatprep.subr.bf16.mxu0 %v336
    %653 = vmatpush1.bf16.msra.mxu0 %v335
    %654 = vmatprep.subr.bf16.mxu0 %v334
    %655 = vmatpush1.bf16.msra.mxu0 %v333
    %656 = vmatprep.subr.bf16.mxu0 %v332
    %657 = vmatpush1.bf16.msra.mxu0 %v331
    %658 = vmatprep.subr.bf16.mxu0 0
    %659 = vmatpush2.bf16.msra.mxu0 0
    %660 = vmatprep.subr.bf16.mxu0 0
    %661 = vmatpush2.bf16.msra.mxu0 0
    %662 = vmatprep.subr.bf16.mxu0 0
    %663 = vmatpush2.bf16.msra.mxu0 0
    %664 = vmatprep.subr.bf16.mxu0 0
    %665 = vmatpush2.bf16.msra.mxu0 0
    %666 = vmatprep.subr.bf16.mxu0 0
    %667 = vmatpush2.bf16.msra.mxu0 0
    %668 = vmatprep.subr.bf16.mxu0 0
    %669 = vmatpush2.bf16.msra.mxu0 0
    %670 = vmatprep.subr.bf16.mxu0 0
    %671 = vmatpush2.bf16.msra.mxu0 0
    %672 = vmatprep.subr.bf16.mxu0 0
    %673 = vmatpush2.bf16.msra.mxu0 0
    %674 = vmatprep.mubr.bf16.mxu0 0
    %675 = vmatmul.mubr.bf16.gmra.mxu0 %v640
    %v676 = vpop.f32.mrf.mxu0
    %v677 = vadd.f32 %v281, %v676
    %v678 = vpop.f32.mrf.mxu0
    %v679 = vadd.f32 %v283, %v678
    %v680 = vpop.f32.mrf.mxu0
    %v681 = vpop.f32.mrf.mxu0
    %682 = vdwg.mxu0
    %v683 = vxor.u32 %v677, 2147483648
    %v684 = vxor.u32 %v679, 2147483648
    %v685 = vmul.f32 %v683, 1.442695
    %v686 = vpow.pop %v685
    %v687 = vmul.f32 %v684, 1.442695
    %v688 = vpow.pop %v687
    %v689 = vadd.f32 %v686, 1.0
    %v690 = vadd.f32 %v688, 1.0
    %v691 = vrcp.pop %v689
    %v692 = vmul.f32 1.0, %v691
    %v693 = vrcp.pop %v690
    %v694 = vmul.f32 1.0, %v693
    %v695 = vtanh.pop %v677
    %v696 = vtanh.pop %v679
    %v697 = vsel %vm123, %v695, %v692
    %v698 = vsel %vm124, %v696, %v694
    %v699 = vmul.f32 %v697, %v632
    %v700 = vmul.f32 %v697, %v698
    %702 = vrot.lane.b32.xlu0 %v700, 64
    %v703 = vpop.permute.xlu0 %702
    %v705 = vadd.f32 %v699, %v703
    %v706 = vtanh.pop %v705
    %v707 = vmul.f32 %v698, %v706
    %v708 = vpack.c.bf16 %v707, %v707
    %710 = vrot.lane.b32.xlu0 %v708, 64
    %v711 = vpop.permute.xlu0 %710
    %v713 = vsel %vm213, %v711, 0
    %715 = vmatprep.subr.bf16.mxu0 0
    %716 = vmatpush1.bf16.msra.mxu0 0
    %717 = vmatprep.subr.bf16.mxu0 0
    %718 = vmatpush1.bf16.msra.mxu0 0
    %719 = vmatprep.subr.bf16.mxu0 0
    %720 = vmatpush1.bf16.msra.mxu0 0
    %721 = vmatprep.subr.bf16.mxu0 0
    %722 = vmatpush1.bf16.msra.mxu0 0
    %723 = vmatprep.subr.bf16.mxu0 %v338
    %724 = vmatpush1.bf16.msra.mxu0 %v337
    %725 = vmatprep.subr.bf16.mxu0 %v336
    %726 = vmatpush1.bf16.msra.mxu0 %v335
    %727 = vmatprep.subr.bf16.mxu0 %v334
    %728 = vmatpush1.bf16.msra.mxu0 %v333
    %729 = vmatprep.subr.bf16.mxu0 %v332
    %730 = vmatpush1.bf16.msra.mxu0 %v331
    %731 = vmatprep.subr.bf16.mxu0 0
    %732 = vmatpush2.bf16.msra.mxu0 0
    %733 = vmatprep.subr.bf16.mxu0 0
    %734 = vmatpush2.bf16.msra.mxu0 0
    %735 = vmatprep.subr.bf16.mxu0 0
    %736 = vmatpush2.bf16.msra.mxu0 0
    %737 = vmatprep.subr.bf16.mxu0 0
    %738 = vmatpush2.bf16.msra.mxu0 0
    %739 = vmatprep.subr.bf16.mxu0 0
    %740 = vmatpush2.bf16.msra.mxu0 0
    %741 = vmatprep.subr.bf16.mxu0 0
    %742 = vmatpush2.bf16.msra.mxu0 0
    %743 = vmatprep.subr.bf16.mxu0 0
    %744 = vmatpush2.bf16.msra.mxu0 0
    %745 = vmatprep.subr.bf16.mxu0 0
    %746 = vmatpush2.bf16.msra.mxu0 0
    %747 = vmatprep.mubr.bf16.mxu0 0
    %748 = vmatmul.mubr.bf16.gmra.mxu0 %v713
    %v749 = vpop.f32.mrf.mxu0
    %v750 = vadd.f32 %v285, %v749
    %v751 = vpop.f32.mrf.mxu0
    %v752 = vadd.f32 %v287, %v751
    %v753 = vpop.f32.mrf.mxu0
    %v754 = vpop.f32.mrf.mxu0
    %755 = vdwg.mxu0
    %v756 = vxor.u32 %v750, 2147483648
    %v757 = vxor.u32 %v752, 2147483648
    %v758 = vmul.f32 %v756, 1.442695
    %v759 = vpow.pop %v758
    %v760 = vmul.f32 %v757, 1.442695
    %v761 = vpow.pop %v760
    %v762 = vadd.f32 %v759, 1.0
    %v763 = vadd.f32 %v761, 1.0
    %v764 = vrcp.pop %v762
    %v765 = vmul.f32 1.0, %v764
    %v766 = vrcp.pop %v763
    %v767 = vmul.f32 1.0, %v766
    %v768 = vtanh.pop %v750
    %v769 = vtanh.pop %v752
    %v770 = vsel %vm123, %v768, %v765
    %v771 = vsel %vm124, %v769, %v767
    %v772 = vmul.f32 %v770, %v705
    %v773 = vmul.f32 %v770, %v771
    %775 = vrot.lane.b32.xlu0 %v773, 64
    %v776 = vpop.permute.xlu0 %775
    %v778 = vadd.f32 %v772, %v776
    %v779 = vtanh.pop %v778
    %v780 = vmul.f32 %v771, %v779
    %v781 = vpack.c.bf16 %v780, %v780
    %783 = vrot.lane.b32.xlu0 %v781, 64
    %v784 = vpop.permute.xlu0 %783
    %v786 = vsel %vm213, %v784, 0
    %788 = vmatprep.subr.bf16.mxu0 0
    %789 = vmatpush1.bf16.msra.mxu0 0
    %790 = vmatprep.subr.bf16.mxu0 0
    %791 = vmatpush1.bf16.msra.mxu0 0
    %792 = vmatprep.subr.bf16.mxu0 0
    %793 = vmatpush1.bf16.msra.mxu0 0
    %794 = vmatprep.subr.bf16.mxu0 0
    %795 = vmatpush1.bf16.msra.mxu0 0
    %796 = vmatprep.subr.bf16.mxu0 %v338
    %797 = vmatpush1.bf16.msra.mxu0 %v337
    %798 = vmatprep.subr.bf16.mxu0 %v336
    %799 = vmatpush1.bf16.msra.mxu0 %v335
    %800 = vmatprep.subr.bf16.mxu0 %v334
    %801 = vmatpush1.bf16.msra.mxu0 %v333
    %802 = vmatprep.subr.bf16.mxu0 %v332
    %803 = vmatpush1.bf16.msra.mxu0 %v331
    %804 = vmatprep.subr.bf16.mxu0 0
    %805 = vmatpush2.bf16.msra.mxu0 0
    %806 = vmatprep.subr.bf16.mxu0 0
    %807 = vmatpush2.bf16.msra.mxu0 0
    %808 = vmatprep.subr.bf16.mxu0 0
    %809 = vmatpush2.bf16.msra.mxu0 0
    %810 = vmatprep.subr.bf16.mxu0 0
    %811 = vmatpush2.bf16.msra.mxu0 0
    %812 = vmatprep.subr.bf16.mxu0 0
    %813 = vmatpush2.bf16.msra.mxu0 0
    %814 = vmatprep.subr.bf16.mxu0 0
    %815 = vmatpush2.bf16.msra.mxu0 0
    %816 = vmatprep.subr.bf16.mxu0 0
    %817 = vmatpush2.bf16.msra.mxu0 0
    %818 = vmatprep.subr.bf16.mxu0 0
    %819 = vmatpush2.bf16.msra.mxu0 0
    %820 = vmatprep.mubr.bf16.mxu0 0
    %821 = vmatmul.mubr.bf16.gmra.mxu0 %v786
    %v822 = vpop.f32.mrf.mxu0
    %v823 = vadd.f32 %v291, %v822
    %v824 = vpop.f32.mrf.mxu0
    %v825 = vadd.f32 %v293, %v824
    %v826 = vpop.f32.mrf.mxu0
    %v827 = vpop.f32.mrf.mxu0
    %828 = vdwg.mxu0
    %v829 = vxor.u32 %v823, 2147483648
    %v830 = vxor.u32 %v825, 2147483648
    %v831 = vmul.f32 %v829, 1.442695
    %v832 = vpow.pop %v831
    %v833 = vmul.f32 %v830, 1.442695
    %v834 = vpow.pop %v833
    %v835 = vadd.f32 %v832, 1.0
    %v836 = vadd.f32 %v834, 1.0
    %v837 = vrcp.pop %v835
    %v838 = vmul.f32 1.0, %v837
    %v839 = vrcp.pop %v836
    %v840 = vmul.f32 1.0, %v839
    %v841 = vtanh.pop %v823
    %v842 = vtanh.pop %v825
    %v843 = vsel %vm123, %v841, %v838
    %v844 = vsel %vm124, %v842, %v840
    %v845 = vmul.f32 %v843, %v778
    %v846 = vmul.f32 %v843, %v844
    %848 = vrot.lane.b32.xlu0 %v846, 64
    %v849 = vpop.permute.xlu0 %848
    %v851 = vadd.f32 %v845, %v849
    %v852 = vtanh.pop %v851
    %v853 = vmul.f32 %v844, %v852
    %v854 = vpack.c.bf16 %v853, %v853
    %856 = vrot.lane.b32.xlu0 %v854, 64
    %v857 = vpop.permute.xlu0 %856
    %v859 = vsel %vm213, %v857, 0
    %861 = vmatprep.subr.bf16.mxu0 0
    %862 = vmatpush1.bf16.msra.mxu0 0
    %863 = vmatprep.subr.bf16.mxu0 0
    %864 = vmatpush1.bf16.msra.mxu0 0
    %865 = vmatprep.subr.bf16.mxu0 0
    %866 = vmatpush1.bf16.msra.mxu0 0
    %867 = vmatprep.subr.bf16.mxu0 0
    %868 = vmatpush1.bf16.msra.mxu0 0
    %869 = vmatprep.subr.bf16.mxu0 %v338
    %870 = vmatpush1.bf16.msra.mxu0 %v337
    %871 = vmatprep.subr.bf16.mxu0 %v336
    %872 = vmatpush1.bf16.msra.mxu0 %v335
    %873 = vmatprep.subr.bf16.mxu0 %v334
    %874 = vmatpush1.bf16.msra.mxu0 %v333
    %875 = vmatprep.subr.bf16.mxu0 %v332
    %876 = vmatpush1.bf16.msra.mxu0 %v331
    %877 = vmatprep.subr.bf16.mxu0 0
    %878 = vmatpush2.bf16.msra.mxu0 0
    %879 = vmatprep.subr.bf16.mxu0 0
    %880 = vmatpush2.bf16.msra.mxu0 0
    %881 = vmatprep.subr.bf16.mxu0 0
    %882 = vmatpush2.bf16.msra.mxu0 0
    %883 = vmatprep.subr.bf16.mxu0 0
    %884 = vmatpush2.bf16.msra.mxu0 0
    %885 = vmatprep.subr.bf16.mxu0 0
    %886 = vmatpush2.bf16.msra.mxu0 0
    %887 = vmatprep.subr.bf16.mxu0 0
    %888 = vmatpush2.bf16.msra.mxu0 0
    %889 = vmatprep.subr.bf16.mxu0 0
    %890 = vmatpush2.bf16.msra.mxu0 0
    %891 = vmatprep.subr.bf16.mxu0 0
    %892 = vmatpush2.bf16.msra.mxu0 0
    %893 = vmatprep.mubr.bf16.mxu0 0
    %894 = vmatmul.mubr.bf16.gmra.mxu0 %v859
    %v895 = vpop.f32.mrf.mxu0
    %v896 = vadd.f32 %v295, %v895
    %v897 = vpop.f32.mrf.mxu0
    %v898 = vadd.f32 %v297, %v897
    %v899 = vpop.f32.mrf.mxu0
    %v900 = vpop.f32.mrf.mxu0
    %901 = vdwg.mxu0
    %v902 = vxor.u32 %v896, 2147483648
    %v903 = vxor.u32 %v898, 2147483648
    %v904 = vmul.f32 %v902, 1.442695
    %v905 = vpow.pop %v904
    %v906 = vmul.f32 %v903, 1.442695
    %v907 = vpow.pop %v906
    %v908 = vadd.f32 %v905, 1.0
    %v909 = vadd.f32 %v907, 1.0
    %v910 = vrcp.pop %v908
    %v911 = vmul.f32 1.0, %v910
    %v912 = vrcp.pop %v909
    %v913 = vmul.f32 1.0, %v912
    %v914 = vtanh.pop %v896
    %v915 = vtanh.pop %v898
    %v916 = vsel %vm123, %v914, %v911
    %v917 = vsel %vm124, %v915, %v913
    %v918 = vmul.f32 %v916, %v851
    %v919 = vmul.f32 %v916, %v917
    %921 = vrot.lane.b32.xlu0 %v919, 64
    %v922 = vpop.permute.xlu0 %921
    %v924 = vadd.f32 %v918, %v922
    %v925 = vtanh.pop %v924
    %v926 = vmul.f32 %v917, %v925
    %935 = vrot.lane.b32.xlu0 %v415, 64
    %v936 = vpop.permute.xlu0 %935
    %937 = vrot.lane.b32.xlu0 %v488, 64
    %v938 = vpop.permute.xlu0 %937
    %939 = vrot.lane.b32.xlu0 %v561, 64
    %v940 = vpop.permute.xlu0 %939
    %941 = vrot.lane.b32.xlu0 %v634, 64
    %v942 = vpop.permute.xlu0 %941
    %943 = vrot.lane.b32.xlu0 %v707, 64
    %v944 = vpop.permute.xlu0 %943
    %945 = vrot.lane.b32.xlu0 %v780, 64
    %v946 = vpop.permute.xlu0 %945
    %947 = vrot.lane.b32.xlu0 %v853, 64
    %v948 = vpop.permute.xlu0 %947
    %949 = vrot.lane.b32.xlu0 %v926, 64
    %v950 = vpop.permute.xlu0 %949
    %v959 = vsel %vm213, %v936, %v926
    %v960 = vsel %vm213, %v938, %v853
    %v961 = vsel %vm213, %v940, %v780
    %v962 = vsel %vm213, %v942, %v707
    %v963 = vsel %vm213, %v944, %v634
    %v964 = vsel %vm213, %v946, %v561
    %v965 = vsel %vm213, %v948, %v488
    %v966 = vsel %vm213, %v950, %v415
    %v967 = vpack.c.bf16 %v960, %v959
    %v968 = vpack.c.bf16 %v962, %v961
    %v969 = vpack.c.bf16 %v964, %v963
    %v970 = vpack.c.bf16 %v966, %v965
    %v971 = vld [vmem:[%s5] sm:$0xff]
    %v972 = vld [vmem:[%s5 + $0x8] sm:$0xff]
    %v973 = vld [vmem:[%s5 + $0x10] sm:$0xff]
    %v974 = vld [vmem:[%s5 + $0x18] sm:$0xff]
    %v975 = vld [vmem:[%s5 + $0x20] sm:$0xff]
    %v976 = vld [vmem:[%s5 + $0x28] sm:$0xff]
    %v977 = vld [vmem:[%s5 + $0x30] sm:$0xff]
    %v978 = vld [vmem:[%s5 + $0x38] sm:$0xff]
    %v979 = vld [vmem:[%s5 + $0x40] sm:$0xff]
    %v980 = vld [vmem:[%s5 + $0x48] sm:$0xff]
    %v981 = vld [vmem:[%s5 + $0x50] sm:$0xff]
    %v982 = vld [vmem:[%s5 + $0x58] sm:$0xff]
    %v983 = vld [vmem:[%s5 + $0x60] sm:$0xff]
    %v984 = vld [vmem:[%s5 + $0x68] sm:$0xff]
    %v985 = vld [vmem:[%s5 + $0x70] sm:$0xff]
    %v986 = vld [vmem:[%s5 + $0x78] sm:$0xff]
    %v987 = vld [vmem:[%s7] sm:$0x3]
    %v989 = vlaneseq
    %v990 = vshrl.u32 %v989, 7
    %v991 = vsub.s32 0, %v990
    %v992 = vrot.slane %v987, %v991
    %v993 = vlaneseq
    %v994 = vshrl.u32 %v993, 7
    %v995 = vsub.s32 1, %v994
    %v996 = vrot.slane %v987, %v995
    %v1015 = vunpack.c.l.b16 %v971
    %v1016 = vunpack.c.h.b16 %v971
    %v1017 = vunpack.c.l.b16 %v972
    %v1018 = vunpack.c.h.b16 %v972
    %v1019 = vunpack.c.l.b16 %v973
    %v1020 = vunpack.c.h.b16 %v973
    %v1021 = vunpack.c.l.b16 %v974
    %v1022 = vunpack.c.h.b16 %v974
    %v1023 = vunpack.c.l.b16 %v975
    %v1024 = vunpack.c.h.b16 %v975
    %v1025 = vunpack.c.l.b16 %v976
    %v1026 = vunpack.c.h.b16 %v976
    %v1027 = vunpack.c.l.b16 %v977
    %v1028 = vunpack.c.h.b16 %v977
    %v1029 = vunpack.c.l.b16 %v978
    %v1030 = vunpack.c.h.b16 %v978
    %v1031 = vunpack.c.l.b16 %v979
    %v1032 = vunpack.c.h.b16 %v979
    %v1033 = vunpack.c.l.b16 %v980
    %v1034 = vunpack.c.h.b16 %v980
    %v1035 = vunpack.c.l.b16 %v981
    %v1036 = vunpack.c.h.b16 %v981
    %v1037 = vunpack.c.l.b16 %v982
    %v1038 = vunpack.c.h.b16 %v982
    %v1039 = vunpack.c.l.b16 %v983
    %v1040 = vunpack.c.h.b16 %v983
    %v1041 = vunpack.c.l.b16 %v984
    %v1042 = vunpack.c.h.b16 %v984
    %v1043 = vunpack.c.l.b16 %v985
    %v1044 = vunpack.c.h.b16 %v985
    %v1045 = vunpack.c.l.b16 %v986
    %v1046 = vunpack.c.h.b16 %v986
    %v1047 = vpack.c.b16 %v1017, %v1015
    %v1048 = vpack.c.b16 %v1018, %v1016
    %v1049 = vpack.c.b16 %v1021, %v1019
    %v1050 = vpack.c.b16 %v1022, %v1020
    %v1051 = vpack.c.b16 %v1025, %v1023
    %v1052 = vpack.c.b16 %v1026, %v1024
    %v1053 = vpack.c.b16 %v1029, %v1027
    %v1054 = vpack.c.b16 %v1030, %v1028
    %v1055 = vpack.c.b16 %v1033, %v1031
    %v1056 = vpack.c.b16 %v1034, %v1032
    %v1057 = vpack.c.b16 %v1037, %v1035
    %v1058 = vpack.c.b16 %v1038, %v1036
    %v1059 = vpack.c.b16 %v1041, %v1039
    %v1060 = vpack.c.b16 %v1042, %v1040
    %v1061 = vpack.c.b16 %v1045, %v1043
    %v1062 = vpack.c.b16 %v1046, %v1044
    %1079 = vmatprep.subr.bf16.mxu0 %v1062
    %1080 = vmatpush1.bf16.msra.mxu0 %v1061
    %1081 = vmatprep.subr.bf16.mxu0 %v1060
    %1082 = vmatpush1.bf16.msra.mxu0 %v1059
    %1083 = vmatprep.subr.bf16.mxu0 %v1058
    %1084 = vmatpush1.bf16.msra.mxu0 %v1057
    %1085 = vmatprep.subr.bf16.mxu0 %v1056
    %1086 = vmatpush1.bf16.msra.mxu0 %v1055
    %1087 = vmatprep.subr.bf16.mxu0 %v1054
    %1088 = vmatpush1.bf16.msra.mxu0 %v1053
    %1089 = vmatprep.subr.bf16.mxu0 %v1052
    %1090 = vmatpush1.bf16.msra.mxu0 %v1051
    %1091 = vmatprep.subr.bf16.mxu0 %v1050
    %1092 = vmatpush1.bf16.msra.mxu0 %v1049
    %1093 = vmatprep.subr.bf16.mxu0 %v1048
    %1094 = vmatpush1.bf16.msra.mxu0 %v1047
    %1095 = vmatprep.subr.bf16.mxu0 0
    %1096 = vmatpush2.bf16.msra.mxu0 0
    %1097 = vmatprep.subr.bf16.mxu0 0
    %1098 = vmatpush2.bf16.msra.mxu0 0
    %1099 = vmatprep.subr.bf16.mxu0 0
    %1100 = vmatpush2.bf16.msra.mxu0 0
    %1101 = vmatprep.subr.bf16.mxu0 0
    %1102 = vmatpush2.bf16.msra.mxu0 0
    %1103 = vmatprep.subr.bf16.mxu0 0
    %1104 = vmatpush2.bf16.msra.mxu0 0
    %1105 = vmatprep.subr.bf16.mxu0 0
    %1106 = vmatpush2.bf16.msra.mxu0 0
    %1107 = vmatprep.subr.bf16.mxu0 0
    %1108 = vmatpush2.bf16.msra.mxu0 0
    %1109 = vmatprep.subr.bf16.mxu0 0
    %1110 = vmatpush2.bf16.msra.mxu0 0
    %1111 = vmatprep.mubr.bf16.mxu0 0
    %1112 = vmatmul.mubr.bf16.gmra.mxu0 %v967
    %v1113 = vpop.f32.mrf.mxu0
    %v1114 = vadd.f32 %v992, %v1113
    %v1115 = vpop.f32.mrf.mxu0
    %v1116 = vadd.f32 %v996, %v1115
    %v1117 = vpop.f32.mrf.mxu0
    %v1118 = vadd.f32 %v992, %v1117
    %v1119 = vpop.f32.mrf.mxu0
    %v1120 = vadd.f32 %v996, %v1119
    %1121 = vmatprep.mubr.bf16.mxu0 0
    %1122 = vmatmul.mubr.bf16.gmra.mxu0 %v968
    %v1123 = vpop.f32.mrf.mxu0
    %v1124 = vadd.f32 %v992, %v1123
    %v1125 = vpop.f32.mrf.mxu0
    %v1126 = vadd.f32 %v996, %v1125
    %v1127 = vpop.f32.mrf.mxu0
    %v1128 = vadd.f32 %v992, %v1127
    %v1129 = vpop.f32.mrf.mxu0
    %v1130 = vadd.f32 %v996, %v1129
    %1131 = vmatprep.mubr.bf16.mxu0 0
    %1132 = vmatmul.mubr.bf16.gmra.mxu0 %v969
    %v1133 = vpop.f32.mrf.mxu0
    %v1134 = vadd.f32 %v992, %v1133
    %v1135 = vpop.f32.mrf.mxu0
    %v1136 = vadd.f32 %v996, %v1135
    %v1137 = vpop.f32.mrf.mxu0
    %v1138 = vadd.f32 %v992, %v1137
    %v1139 = vpop.f32.mrf.mxu0
    %v1140 = vadd.f32 %v996, %v1139
    %1141 = vmatprep.mubr.bf16.mxu0 0
    %1142 = vmatmul.mubr.bf16.gmra.mxu0 %v970
    %v1143 = vpop.f32.mrf.mxu0
    %v1144 = vadd.f32 %v992, %v1143
    %v1145 = vpop.f32.mrf.mxu0
    %v1146 = vadd.f32 %v996, %v1145
    %v1147 = vpop.f32.mrf.mxu0
    %v1148 = vadd.f32 %v992, %v1147
    %v1149 = vpop.f32.mrf.mxu0
    %v1150 = vadd.f32 %v996, %v1149
    %1151 = vdwg.mxu0
    %v1152 = vld [vmem:[#allocation10] sm:$0xff]
    %v1153 = vld [vmem:[#allocation10 + $0x8] sm:$0xff]
    %v1154 = vld [vmem:[#allocation10 + $0x10] sm:$0xff]
    %v1155 = vld [vmem:[#allocation10 + $0x18] sm:$0xff]
    %v1156 = vld [vmem:[#allocation10 + $0x20] sm:$0xff]
    %v1157 = vld [vmem:[#allocation10 + $0x28] sm:$0xff]
    %v1158 = vld [vmem:[#allocation10 + $0x30] sm:$0xff]
    %v1159 = vld [vmem:[#allocation10 + $0x38] sm:$0xff]
    %v1168 = vunpack.c.l.b16 %v1152
    %v1169 = vunpack.c.h.b16 %v1152
    %v1170 = vunpack.c.l.b16 %v1153
    %v1171 = vunpack.c.h.b16 %v1153
    %v1172 = vunpack.c.l.b16 %v1154
    %v1173 = vunpack.c.h.b16 %v1154
    %v1174 = vunpack.c.l.b16 %v1155
    %v1175 = vunpack.c.h.b16 %v1155
    %v1176 = vunpack.c.l.b16 %v1156
    %v1177 = vunpack.c.h.b16 %v1156
    %v1178 = vunpack.c.l.b16 %v1157
    %v1179 = vunpack.c.h.b16 %v1157
    %v1180 = vunpack.c.l.b16 %v1158
    %v1181 = vunpack.c.h.b16 %v1158
    %v1182 = vunpack.c.l.b16 %v1159
    %v1183 = vunpack.c.h.b16 %v1159
    %v1184 = vpack.c.b16 %v1170, %v1168
    %v1185 = vpack.c.b16 %v1171, %v1169
    %v1186 = vpack.c.b16 %v1174, %v1172
    %v1187 = vpack.c.b16 %v1175, %v1173
    %v1188 = vpack.c.b16 %v1178, %v1176
    %v1189 = vpack.c.b16 %v1179, %v1177
    %v1190 = vpack.c.b16 %v1182, %v1180
    %v1191 = vpack.c.b16 %v1183, %v1181
    %1200 = vmatprep.subr.bf16.mxu0 0
    %1201 = vmatpush1.bf16.msra.mxu0 0
    %1202 = vmatprep.subr.bf16.mxu0 0
    %1203 = vmatpush1.bf16.msra.mxu0 0
    %1204 = vmatprep.subr.bf16.mxu0 0
    %1205 = vmatpush1.bf16.msra.mxu0 0
    %1206 = vmatprep.subr.bf16.mxu0 0
    %1207 = vmatpush1.bf16.msra.mxu0 0
    %1208 = vmatprep.subr.bf16.mxu0 %v1191
    %1209 = vmatpush1.bf16.msra.mxu0 %v1190
    %1210 = vmatprep.subr.bf16.mxu0 %v1189
    %1211 = vmatpush1.bf16.msra.mxu0 %v1188
    %1212 = vmatprep.subr.bf16.mxu0 %v1187
    %1213 = vmatpush1.bf16.msra.mxu0 %v1186
    %1214 = vmatprep.subr.bf16.mxu0 %v1185
    %1215 = vmatpush1.bf16.msra.mxu0 %v1184
    %1216 = vmatprep.subr.bf16.mxu0 0
    %1217 = vmatpush2.bf16.msra.mxu0 0
    %1218 = vmatprep.subr.bf16.mxu0 0
    %1219 = vmatpush2.bf16.msra.mxu0 0
    %1220 = vmatprep.subr.bf16.mxu0 0
    %1221 = vmatpush2.bf16.msra.mxu0 0
    %1222 = vmatprep.subr.bf16.mxu0 0
    %1223 = vmatpush2.bf16.msra.mxu0 0
    %1224 = vmatprep.subr.bf16.mxu0 0
    %1225 = vmatpush2.bf16.msra.mxu0 0
    %1226 = vmatprep.subr.bf16.mxu0 0
    %1227 = vmatpush2.bf16.msra.mxu0 0
    %1228 = vmatprep.subr.bf16.mxu0 0
    %1229 = vmatpush2.bf16.msra.mxu0 0
    %1230 = vmatprep.subr.bf16.mxu0 0
    %1231 = vmatpush2.bf16.msra.mxu0 0
    %1232 = vmatprep.mubr.bf16.mxu0 0
    %1233 = vmatmul.mubr.bf16.gmra.mxu0 %v348
    %v1234 = vpop.f32.mrf.mxu0
    %v1235 = vadd.f32 %v1114, %v1234
    %v1236 = vpop.f32.mrf.mxu0
    %v1237 = vadd.f32 %v1116, %v1236
    %v1238 = vpop.f32.mrf.mxu0
    %v1239 = vpop.f32.mrf.mxu0
    %1240 = vdwg.mxu0
    %v1241 = vxor.u32 %v1235, 2147483648
    %v1242 = vxor.u32 %v1237, 2147483648
    %v1243 = vmul.f32 %v1241, 1.442695
    %v1244 = vpow.pop %v1243
    %v1245 = vmul.f32 %v1242, 1.442695
    %v1246 = vpow.pop %v1245
    %v1247 = vadd.f32 %v1244, 1.0
    %v1248 = vadd.f32 %v1246, 1.0
    %v1249 = vrcp.pop %v1247
    %v1250 = vmul.f32 1.0, %v1249
    %v1251 = vrcp.pop %v1248
    %v1252 = vmul.f32 1.0, %v1251
    %v1253 = vtanh.pop %v1235
    %v1254 = vtanh.pop %v1237
    %v1255 = vsel %vm123, %v1253, %v1250
    %v1256 = vsel %vm124, %v1254, %v1252
    %v1257 = vmul.f32 %v1255, 0.0
    %v1258 = vmul.f32 %v1255, %v1256
    %1260 = vrot.lane.b32.xlu0 %v1258, 64
    %v1261 = vpop.permute.xlu0 %1260
    %v1263 = vadd.f32 %v1257, %v1261
    %v1264 = vtanh.pop %v1263
    %v1265 = vmul.f32 %v1256, %v1264
    %v1266 = vpack.c.bf16 %v1265, %v1265
    %1268 = vrot.lane.b32.xlu0 %v1266, 64
    %v1269 = vpop.permute.xlu0 %1268
    %v1271 = vsel %vm213, %v1269, 0
    %1273 = vmatprep.subr.bf16.mxu0 0
    %1274 = vmatpush1.bf16.msra.mxu0 0
    %1275 = vmatprep.subr.bf16.mxu0 0
    %1276 = vmatpush1.bf16.msra.mxu0 0
    %1277 = vmatprep.subr.bf16.mxu0 0
    %1278 = vmatpush1.bf16.msra.mxu0 0
    %1279 = vmatprep.subr.bf16.mxu0 0
    %1280 = vmatpush1.bf16.msra.mxu0 0
    %1281 = vmatprep.subr.bf16.mxu0 %v1191
    %1282 = vmatpush1.bf16.msra.mxu0 %v1190
    %1283 = vmatprep.subr.bf16.mxu0 %v1189
    %1284 = vmatpush1.bf16.msra.mxu0 %v1188
    %1285 = vmatprep.subr.bf16.mxu0 %v1187
    %1286 = vmatpush1.bf16.msra.mxu0 %v1186
    %1287 = vmatprep.subr.bf16.mxu0 %v1185
    %1288 = vmatpush1.bf16.msra.mxu0 %v1184
    %1289 = vmatprep.subr.bf16.mxu0 0
    %1290 = vmatpush2.bf16.msra.mxu0 0
    %1291 = vmatprep.subr.bf16.mxu0 0
    %1292 = vmatpush2.bf16.msra.mxu0 0
    %1293 = vmatprep.subr.bf16.mxu0 0
    %1294 = vmatpush2.bf16.msra.mxu0 0
    %1295 = vmatprep.subr.bf16.mxu0 0
    %1296 = vmatpush2.bf16.msra.mxu0 0
    %1297 = vmatprep.subr.bf16.mxu0 0
    %1298 = vmatpush2.bf16.msra.mxu0 0
    %1299 = vmatprep.subr.bf16.mxu0 0
    %1300 = vmatpush2.bf16.msra.mxu0 0
    %1301 = vmatprep.subr.bf16.mxu0 0
    %1302 = vmatpush2.bf16.msra.mxu0 0
    %1303 = vmatprep.subr.bf16.mxu0 0
    %1304 = vmatpush2.bf16.msra.mxu0 0
    %1305 = vmatprep.mubr.bf16.mxu0 0
    %1306 = vmatmul.mubr.bf16.gmra.mxu0 %v1271
    %v1307 = vpop.f32.mrf.mxu0
    %v1308 = vadd.f32 %v1118, %v1307
    %v1309 = vpop.f32.mrf.mxu0
    %v1310 = vadd.f32 %v1120, %v1309
    %v1311 = vpop.f32.mrf.mxu0
    %v1312 = vpop.f32.mrf.mxu0
    %1313 = vdwg.mxu0
    %v1314 = vxor.u32 %v1308, 2147483648
    %v1315 = vxor.u32 %v1310, 2147483648
    %v1316 = vmul.f32 %v1314, 1.442695
    %v1317 = vpow.pop %v1316
    %v1318 = vmul.f32 %v1315, 1.442695
    %v1319 = vpow.pop %v1318
    %v1320 = vadd.f32 %v1317, 1.0
    %v1321 = vadd.f32 %v1319, 1.0
    %v1322 = vrcp.pop %v1320
    %v1323 = vmul.f32 1.0, %v1322
    %v1324 = vrcp.pop %v1321
    %v1325 = vmul.f32 1.0, %v1324
    %v1326 = vtanh.pop %v1308
    %v1327 = vtanh.pop %v1310
    %v1328 = vsel %vm123, %v1326, %v1323
    %v1329 = vsel %vm124, %v1327, %v1325
    %v1330 = vmul.f32 %v1328, %v1263
    %v1331 = vmul.f32 %v1328, %v1329
    %1333 = vrot.lane.b32.xlu0 %v1331, 64
    %v1334 = vpop.permute.xlu0 %1333
    %v1336 = vadd.f32 %v1330, %v1334
    %v1337 = vtanh.pop %v1336
    %v1338 = vmul.f32 %v1329, %v1337
    %v1339 = vpack.c.bf16 %v1338, %v1338
    %1341 = vrot.lane.b32.xlu0 %v1339, 64
    %v1342 = vpop.permute.xlu0 %1341
    %v1344 = vsel %vm213, %v1342, 0
    %1346 = vmatprep.subr.bf16.mxu0 0
    %1347 = vmatpush1.bf16.msra.mxu0 0
    %1348 = vmatprep.subr.bf16.mxu0 0
    %1349 = vmatpush1.bf16.msra.mxu0 0
    %1350 = vmatprep.subr.bf16.mxu0 0
    %1351 = vmatpush1.bf16.msra.mxu0 0
    %1352 = vmatprep.subr.bf16.mxu0 0
    %1353 = vmatpush1.bf16.msra.mxu0 0
    %1354 = vmatprep.subr.bf16.mxu0 %v1191
    %1355 = vmatpush1.bf16.msra.mxu0 %v1190
    %1356 = vmatprep.subr.bf16.mxu0 %v1189
    %1357 = vmatpush1.bf16.msra.mxu0 %v1188
    %1358 = vmatprep.subr.bf16.mxu0 %v1187
    %1359 = vmatpush1.bf16.msra.mxu0 %v1186
    %1360 = vmatprep.subr.bf16.mxu0 %v1185
    %1361 = vmatpush1.bf16.msra.mxu0 %v1184
    %1362 = vmatprep.subr.bf16.mxu0 0
    %1363 = vmatpush2.bf16.msra.mxu0 0
    %1364 = vmatprep.subr.bf16.mxu0 0
    %1365 = vmatpush2.bf16.msra.mxu0 0
    %1366 = vmatprep.subr.bf16.mxu0 0
    %1367 = vmatpush2.bf16.msra.mxu0 0
    %1368 = vmatprep.subr.bf16.mxu0 0
    %1369 = vmatpush2.bf16.msra.mxu0 0
    %1370 = vmatprep.subr.bf16.mxu0 0
    %1371 = vmatpush2.bf16.msra.mxu0 0
    %1372 = vmatprep.subr.bf16.mxu0 0
    %1373 = vmatpush2.bf16.msra.mxu0 0
    %1374 = vmatprep.subr.bf16.mxu0 0
    %1375 = vmatpush2.bf16.msra.mxu0 0
    %1376 = vmatprep.subr.bf16.mxu0 0
    %1377 = vmatpush2.bf16.msra.mxu0 0
    %1378 = vmatprep.mubr.bf16.mxu0 0
    %1379 = vmatmul.mubr.bf16.gmra.mxu0 %v1344
    %v1380 = vpop.f32.mrf.mxu0
    %v1381 = vadd.f32 %v1124, %v1380
    %v1382 = vpop.f32.mrf.mxu0
    %v1383 = vadd.f32 %v1126, %v1382
    %v1384 = vpop.f32.mrf.mxu0
    %v1385 = vpop.f32.mrf.mxu0
    %1386 = vdwg.mxu0
    %v1387 = vxor.u32 %v1381, 2147483648
    %v1388 = vxor.u32 %v1383, 2147483648
    %v1389 = vmul.f32 %v1387, 1.442695
    %v1390 = vpow.pop %v1389
    %v1391 = vmul.f32 %v1388, 1.442695
    %v1392 = vpow.pop %v1391
    %v1393 = vadd.f32 %v1390, 1.0
    %v1394 = vadd.f32 %v1392, 1.0
    %v1395 = vrcp.pop %v1393
    %v1396 = vmul.f32 1.0, %v1395
    %v1397 = vrcp.pop %v1394
    %v1398 = vmul.f32 1.0, %v1397
    %v1399 = vtanh.pop %v1381
    %v1400 = vtanh.pop %v1383
    %v1401 = vsel %vm123, %v1399, %v1396
    %v1402 = vsel %vm124, %v1400, %v1398
    %v1403 = vmul.f32 %v1401, %v1336
    %v1404 = vmul.f32 %v1401, %v1402
    %1406 = vrot.lane.b32.xlu0 %v1404, 64
    %v1407 = vpop.permute.xlu0 %1406
    %v1409 = vadd.f32 %v1403, %v1407
    %v1410 = vtanh.pop %v1409
    %v1411 = vmul.f32 %v1402, %v1410
    %v1412 = vpack.c.bf16 %v1411, %v1411
    %1414 = vrot.lane.b32.xlu0 %v1412, 64
    %v1415 = vpop.permute.xlu0 %1414
    %v1417 = vsel %vm213, %v1415, 0
    %1419 = vmatprep.subr.bf16.mxu0 0
    %1420 = vmatpush1.bf16.msra.mxu0 0
    %1421 = vmatprep.subr.bf16.mxu0 0
    %1422 = vmatpush1.bf16.msra.mxu0 0
    %1423 = vmatprep.subr.bf16.mxu0 0
    %1424 = vmatpush1.bf16.msra.mxu0 0
    %1425 = vmatprep.subr.bf16.mxu0 0
    %1426 = vmatpush1.bf16.msra.mxu0 0
    %1427 = vmatprep.subr.bf16.mxu0 %v1191
    %1428 = vmatpush1.bf16.msra.mxu0 %v1190
    %1429 = vmatprep.subr.bf16.mxu0 %v1189
    %1430 = vmatpush1.bf16.msra.mxu0 %v1188
    %1431 = vmatprep.subr.bf16.mxu0 %v1187
    %1432 = vmatpush1.bf16.msra.mxu0 %v1186
    %1433 = vmatprep.subr.bf16.mxu0 %v1185
    %1434 = vmatpush1.bf16.msra.mxu0 %v1184
    %1435 = vmatprep.subr.bf16.mxu0 0
    %1436 = vmatpush2.bf16.msra.mxu0 0
    %1437 = vmatprep.subr.bf16.mxu0 0
    %1438 = vmatpush2.bf16.msra.mxu0 0
    %1439 = vmatprep.subr.bf16.mxu0 0
    %1440 = vmatpush2.bf16.msra.mxu0 0
    %1441 = vmatprep.subr.bf16.mxu0 0
    %1442 = vmatpush2.bf16.msra.mxu0 0
    %1443 = vmatprep.subr.bf16.mxu0 0
    %1444 = vmatpush2.bf16.msra.mxu0 0
    %1445 = vmatprep.subr.bf16.mxu0 0
    %1446 = vmatpush2.bf16.msra.mxu0 0
    %1447 = vmatprep.subr.bf16.mxu0 0
    %1448 = vmatpush2.bf16.msra.mxu0 0
    %1449 = vmatprep.subr.bf16.mxu0 0
    %1450 = vmatpush2.bf16.msra.mxu0 0
    %1451 = vmatprep.mubr.bf16.mxu0 0
    %1452 = vmatmul.mubr.bf16.gmra.mxu0 %v1417
    %v1453 = vpop.f32.mrf.mxu0
    %v1454 = vadd.f32 %v1128, %v1453
    %v1455 = vpop.f32.mrf.mxu0
    %v1456 = vadd.f32 %v1130, %v1455
    %v1457 = vpop.f32.mrf.mxu0
    %v1458 = vpop.f32.mrf.mxu0
    %1459 = vdwg.mxu0
    %v1460 = vxor.u32 %v1454, 2147483648
    %v1461 = vxor.u32 %v1456, 2147483648
    %v1462 = vmul.f32 %v1460, 1.442695
    %v1463 = vpow.pop %v1462
    %v1464 = vmul.f32 %v1461, 1.442695
    %v1465 = vpow.pop %v1464
    %v1466 = vadd.f32 %v1463, 1.0
    %v1467 = vadd.f32 %v1465, 1.0
    %v1468 = vrcp.pop %v1466
    %v1469 = vmul.f32 1.0, %v1468
    %v1470 = vrcp.pop %v1467
    %v1471 = vmul.f32 1.0, %v1470
    %v1472 = vtanh.pop %v1454
    %v1473 = vtanh.pop %v1456
    %v1474 = vsel %vm123, %v1472, %v1469
    %v1475 = vsel %vm124, %v1473, %v1471
    %v1476 = vmul.f32 %v1474, %v1409
    %v1477 = vmul.f32 %v1474, %v1475
    %1479 = vrot.lane.b32.xlu0 %v1477, 64
    %v1480 = vpop.permute.xlu0 %1479
    %v1482 = vadd.f32 %v1476, %v1480
    %v1483 = vtanh.pop %v1482
    %v1484 = vmul.f32 %v1475, %v1483
    %v1485 = vpack.c.bf16 %v1484, %v1484
    %1487 = vrot.lane.b32.xlu0 %v1485, 64
    %v1488 = vpop.permute.xlu0 %1487
    %v1490 = vsel %vm213, %v1488, 0
    %1492 = vmatprep.subr.bf16.mxu0 0
    %1493 = vmatpush1.bf16.msra.mxu0 0
    %1494 = vmatprep.subr.bf16.mxu0 0
    %1495 = vmatpush1.bf16.msra.mxu0 0
    %1496 = vmatprep.subr.bf16.mxu0 0
    %1497 = vmatpush1.bf16.msra.mxu0 0
    %1498 = vmatprep.subr.bf16.mxu0 0
    %1499 = vmatpush1.bf16.msra.mxu0 0
    %1500 = vmatprep.subr.bf16.mxu0 %v1191
    %1501 = vmatpush1.bf16.msra.mxu0 %v1190
    %1502 = vmatprep.subr.bf16.mxu0 %v1189
    %1503 = vmatpush1.bf16.msra.mxu0 %v1188
    %1504 = vmatprep.subr.bf16.mxu0 %v1187
    %1505 = vmatpush1.bf16.msra.mxu0 %v1186
    %1506 = vmatprep.subr.bf16.mxu0 %v1185
    %1507 = vmatpush1.bf16.msra.mxu0 %v1184
    %1508 = vmatprep.subr.bf16.mxu0 0
    %1509 = vmatpush2.bf16.msra.mxu0 0
    %1510 = vmatprep.subr.bf16.mxu0 0
    %1511 = vmatpush2.bf16.msra.mxu0 0
    %1512 = vmatprep.subr.bf16.mxu0 0
    %1513 = vmatpush2.bf16.msra.mxu0 0
    %1514 = vmatprep.subr.bf16.mxu0 0
    %1515 = vmatpush2.bf16.msra.mxu0 0
    %1516 = vmatprep.subr.bf16.mxu0 0
    %1517 = vmatpush2.bf16.msra.mxu0 0
    %1518 = vmatprep.subr.bf16.mxu0 0
    %1519 = vmatpush2.bf16.msra.mxu0 0
    %1520 = vmatprep.subr.bf16.mxu0 0
    %1521 = vmatpush2.bf16.msra.mxu0 0
    %1522 = vmatprep.subr.bf16.mxu0 0
    %1523 = vmatpush2.bf16.msra.mxu0 0
    %1524 = vmatprep.mubr.bf16.mxu0 0
    %1525 = vmatmul.mubr.bf16.gmra.mxu0 %v1490
    %v1526 = vpop.f32.mrf.mxu0
    %v1527 = vadd.f32 %v1134, %v1526
    %v1528 = vpop.f32.mrf.mxu0
    %v1529 = vadd.f32 %v1136, %v1528
    %v1530 = vpop.f32.mrf.mxu0
    %v1531 = vpop.f32.mrf.mxu0
    %1532 = vdwg.mxu0
    %v1533 = vxor.u32 %v1527, 2147483648
    %v1534 = vxor.u32 %v1529, 2147483648
    %v1535 = vmul.f32 %v1533, 1.442695
    %v1536 = vpow.pop %v1535
    %v1537 = vmul.f32 %v1534, 1.442695
    %v1538 = vpow.pop %v1537
    %v1539 = vadd.f32 %v1536, 1.0
    %v1540 = vadd.f32 %v1538, 1.0
    %v1541 = vrcp.pop %v1539
    %v1542 = vmul.f32 1.0, %v1541
    %v1543 = vrcp.pop %v1540
    %v1544 = vmul.f32 1.0, %v1543
    %v1545 = vtanh.pop %v1527
    %v1546 = vtanh.pop %v1529
    %v1547 = vsel %vm123, %v1545, %v1542
    %v1548 = vsel %vm124, %v1546, %v1544
    %v1549 = vmul.f32 %v1547, %v1482
    %v1550 = vmul.f32 %v1547, %v1548
    %1552 = vrot.lane.b32.xlu0 %v1550, 64
    %v1553 = vpop.permute.xlu0 %1552
    %v1555 = vadd.f32 %v1549, %v1553
    %v1556 = vtanh.pop %v1555
    %v1557 = vmul.f32 %v1548, %v1556
    %v1558 = vpack.c.bf16 %v1557, %v1557
    %1560 = vrot.lane.b32.xlu0 %v1558, 64
    %v1561 = vpop.permute.xlu0 %1560
    %v1563 = vsel %vm213, %v1561, 0
    %1565 = vmatprep.subr.bf16.mxu0 0
    %1566 = vmatpush1.bf16.msra.mxu0 0
    %1567 = vmatprep.subr.bf16.mxu0 0
    %1568 = vmatpush1.bf16.msra.mxu0 0
    %1569 = vmatprep.subr.bf16.mxu0 0
    %1570 = vmatpush1.bf16.msra.mxu0 0
    %1571 = vmatprep.subr.bf16.mxu0 0
    %1572 = vmatpush1.bf16.msra.mxu0 0
    %1573 = vmatprep.subr.bf16.mxu0 %v1191
    %1574 = vmatpush1.bf16.msra.mxu0 %v1190
    %1575 = vmatprep.subr.bf16.mxu0 %v1189
    %1576 = vmatpush1.bf16.msra.mxu0 %v1188
    %1577 = vmatprep.subr.bf16.mxu0 %v1187
    %1578 = vmatpush1.bf16.msra.mxu0 %v1186
    %1579 = vmatprep.subr.bf16.mxu0 %v1185
    %1580 = vmatpush1.bf16.msra.mxu0 %v1184
    %1581 = vmatprep.subr.bf16.mxu0 0
    %1582 = vmatpush2.bf16.msra.mxu0 0
    %1583 = vmatprep.subr.bf16.mxu0 0
    %1584 = vmatpush2.bf16.msra.mxu0 0
    %1585 = vmatprep.subr.bf16.mxu0 0
    %1586 = vmatpush2.bf16.msra.mxu0 0
    %1587 = vmatprep.subr.bf16.mxu0 0
    %1588 = vmatpush2.bf16.msra.mxu0 0
    %1589 = vmatprep.subr.bf16.mxu0 0
    %1590 = vmatpush2.bf16.msra.mxu0 0
    %1591 = vmatprep.subr.bf16.mxu0 0
    %1592 = vmatpush2.bf16.msra.mxu0 0
    %1593 = vmatprep.subr.bf16.mxu0 0
    %1594 = vmatpush2.bf16.msra.mxu0 0
    %1595 = vmatprep.subr.bf16.mxu0 0
    %1596 = vmatpush2.bf16.msra.mxu0 0
    %1597 = vmatprep.mubr.bf16.mxu0 0
    %1598 = vmatmul.mubr.bf16.gmra.mxu0 %v1563
    %v1599 = vpop.f32.mrf.mxu0
    %v1600 = vadd.f32 %v1138, %v1599
    %v1601 = vpop.f32.mrf.mxu0
    %v1602 = vadd.f32 %v1140, %v1601
    %v1603 = vpop.f32.mrf.mxu0
    %v1604 = vpop.f32.mrf.mxu0
    %1605 = vdwg.mxu0
    %v1606 = vxor.u32 %v1600, 2147483648
    %v1607 = vxor.u32 %v1602, 2147483648
    %v1608 = vmul.f32 %v1606, 1.442695
    %v1609 = vpow.pop %v1608
    %v1610 = vmul.f32 %v1607, 1.442695
    %v1611 = vpow.pop %v1610
    %v1612 = vadd.f32 %v1609, 1.0
    %v1613 = vadd.f32 %v1611, 1.0
    %v1614 = vrcp.pop %v1612
    %v1615 = vmul.f32 1.0, %v1614
    %v1616 = vrcp.pop %v1613
    %v1617 = vmul.f32 1.0, %v1616
    %v1618 = vtanh.pop %v1600
    %v1619 = vtanh.pop %v1602
    %v1620 = vsel %vm123, %v1618, %v1615
    %v1621 = vsel %vm124, %v1619, %v1617
    %v1622 = vmul.f32 %v1620, %v1555
    %v1623 = vmul.f32 %v1620, %v1621
    %1625 = vrot.lane.b32.xlu0 %v1623, 64
    %v1626 = vpop.permute.xlu0 %1625
    %v1628 = vadd.f32 %v1622, %v1626
    %v1629 = vtanh.pop %v1628
    %v1630 = vmul.f32 %v1621, %v1629
    %v1631 = vpack.c.bf16 %v1630, %v1630
    %1633 = vrot.lane.b32.xlu0 %v1631, 64
    %v1634 = vpop.permute.xlu0 %1633
    %v1636 = vsel %vm213, %v1634, 0
    %1638 = vmatprep.subr.bf16.mxu0 0
    %1639 = vmatpush1.bf16.msra.mxu0 0
    %1640 = vmatprep.subr.bf16.mxu0 0
    %1641 = vmatpush1.bf16.msra.mxu0 0
    %1642 = vmatprep.subr.bf16.mxu0 0
    %1643 = vmatpush1.bf16.msra.mxu0 0
    %1644 = vmatprep.subr.bf16.mxu0 0
    %1645 = vmatpush1.bf16.msra.mxu0 0
    %1646 = vmatprep.subr.bf16.mxu0 %v1191
    %1647 = vmatpush1.bf16.msra.mxu0 %v1190
    %1648 = vmatprep.subr.bf16.mxu0 %v1189
    %1649 = vmatpush1.bf16.msra.mxu0 %v1188
    %1650 = vmatprep.subr.bf16.mxu0 %v1187
    %1651 = vmatpush1.bf16.msra.mxu0 %v1186
    %1652 = vmatprep.subr.bf16.mxu0 %v1185
    %1653 = vmatpush1.bf16.msra.mxu0 %v1184
    %1654 = vmatprep.subr.bf16.mxu0 0
    %1655 = vmatpush2.bf16.msra.mxu0 0
    %1656 = vmatprep.subr.bf16.mxu0 0
    %1657 = vmatpush2.bf16.msra.mxu0 0
    %1658 = vmatprep.subr.bf16.mxu0 0
    %1659 = vmatpush2.bf16.msra.mxu0 0
    %1660 = vmatprep.subr.bf16.mxu0 0
    %1661 = vmatpush2.bf16.msra.mxu0 0
    %1662 = vmatprep.subr.bf16.mxu0 0
    %1663 = vmatpush2.bf16.msra.mxu0 0
    %1664 = vmatprep.subr.bf16.mxu0 0
    %1665 = vmatpush2.bf16.msra.mxu0 0
    %1666 = vmatprep.subr.bf16.mxu0 0
    %1667 = vmatpush2.bf16.msra.mxu0 0
    %1668 = vmatprep.subr.bf16.mxu0 0
    %1669 = vmatpush2.bf16.msra.mxu0 0
    %1670 = vmatprep.mubr.bf16.mxu0 0
    %1671 = vmatmul.mubr.bf16.gmra.mxu0 %v1636
    %v1672 = vpop.f32.mrf.mxu0
    %v1673 = vadd.f32 %v1144, %v1672
    %v1674 = vpop.f32.mrf.mxu0
    %v1675 = vadd.f32 %v1146, %v1674
    %v1676 = vpop.f32.mrf.mxu0
    %v1677 = vpop.f32.mrf.mxu0
    %1678 = vdwg.mxu0
    %v1679 = vxor.u32 %v1673, 2147483648
    %v1680 = vxor.u32 %v1675, 2147483648
    %v1681 = vmul.f32 %v1679, 1.442695
    %v1682 = vpow.pop %v1681
    %v1683 = vmul.f32 %v1680, 1.442695
    %v1684 = vpow.pop %v1683
    %v1685 = vadd.f32 %v1682, 1.0
    %v1686 = vadd.f32 %v1684, 1.0
    %v1687 = vrcp.pop %v1685
    %v1688 = vmul.f32 1.0, %v1687
    %v1689 = vrcp.pop %v1686
    %v1690 = vmul.f32 1.0, %v1689
    %v1691 = vtanh.pop %v1673
    %v1692 = vtanh.pop %v1675
    %v1693 = vsel %vm123, %v1691, %v1688
    %v1694 = vsel %vm124, %v1692, %v1690
    %v1695 = vmul.f32 %v1693, %v1628
    %v1696 = vmul.f32 %v1693, %v1694
    %1698 = vrot.lane.b32.xlu0 %v1696, 64
    %v1699 = vpop.permute.xlu0 %1698
    %v1701 = vadd.f32 %v1695, %v1699
    %v1702 = vtanh.pop %v1701
    %v1703 = vmul.f32 %v1694, %v1702
    %v1704 = vpack.c.bf16 %v1703, %v1703
    %1706 = vrot.lane.b32.xlu0 %v1704, 64
    %v1707 = vpop.permute.xlu0 %1706
    %v1709 = vsel %vm213, %v1707, 0
    %1711 = vmatprep.subr.bf16.mxu0 0
    %1712 = vmatpush1.bf16.msra.mxu0 0
    %1713 = vmatprep.subr.bf16.mxu0 0
    %1714 = vmatpush1.bf16.msra.mxu0 0
    %1715 = vmatprep.subr.bf16.mxu0 0
    %1716 = vmatpush1.bf16.msra.mxu0 0
    %1717 = vmatprep.subr.bf16.mxu0 0
    %1718 = vmatpush1.bf16.msra.mxu0 0
    %1719 = vmatprep.subr.bf16.mxu0 %v1191
    %1720 = vmatpush1.bf16.msra.mxu0 %v1190
    %1721 = vmatprep.subr.bf16.mxu0 %v1189
    %1722 = vmatpush1.bf16.msra.mxu0 %v1188
    %1723 = vmatprep.subr.bf16.mxu0 %v1187
    %1724 = vmatpush1.bf16.msra.mxu0 %v1186
    %1725 = vmatprep.subr.bf16.mxu0 %v1185
    %1726 = vmatpush1.bf16.msra.mxu0 %v1184
    %1727 = vmatprep.subr.bf16.mxu0 0
    %1728 = vmatpush2.bf16.msra.mxu0 0
    %1729 = vmatprep.subr.bf16.mxu0 0
    %1730 = vmatpush2.bf16.msra.mxu0 0
    %1731 = vmatprep.subr.bf16.mxu0 0
    %1732 = vmatpush2.bf16.msra.mxu0 0
    %1733 = vmatprep.subr.bf16.mxu0 0
    %1734 = vmatpush2.bf16.msra.mxu0 0
    %1735 = vmatprep.subr.bf16.mxu0 0
    %1736 = vmatpush2.bf16.msra.mxu0 0
    %1737 = vmatprep.subr.bf16.mxu0 0
    %1738 = vmatpush2.bf16.msra.mxu0 0
    %1739 = vmatprep.subr.bf16.mxu0 0
    %1740 = vmatpush2.bf16.msra.mxu0 0
    %1741 = vmatprep.subr.bf16.mxu0 0
    %1742 = vmatpush2.bf16.msra.mxu0 0
    %1743 = vmatprep.mubr.bf16.mxu0 0
    %1744 = vmatmul.mubr.bf16.gmra.mxu0 %v1709
    %v1745 = vpop.f32.mrf.mxu0
    %v1746 = vadd.f32 %v1148, %v1745
    %v1747 = vpop.f32.mrf.mxu0
    %v1748 = vadd.f32 %v1150, %v1747
    %v1749 = vpop.f32.mrf.mxu0
    %v1750 = vpop.f32.mrf.mxu0
    %1751 = vdwg.mxu0
    %v1752 = vxor.u32 %v1746, 2147483648
    %v1753 = vxor.u32 %v1748, 2147483648
    %v1754 = vmul.f32 %v1752, 1.442695
    %v1755 = vpow.pop %v1754
    %v1756 = vmul.f32 %v1753, 1.442695
    %v1757 = vpow.pop %v1756
    %v1758 = vadd.f32 %v1755, 1.0
    %v1759 = vadd.f32 %v1757, 1.0
    %v1760 = vrcp.pop %v1758
    %v1761 = vmul.f32 1.0, %v1760
    %v1762 = vrcp.pop %v1759
    %v1763 = vmul.f32 1.0, %v1762
    %v1764 = vtanh.pop %v1746
    %v1765 = vtanh.pop %v1748
    %v1766 = vsel %vm123, %v1764, %v1761
    %v1767 = vsel %vm124, %v1765, %v1763
    %v1768 = vmul.f32 %v1766, %v1701
    %v1769 = vmul.f32 %v1766, %v1767
    %1771 = vrot.lane.b32.xlu0 %v1769, 64
    %v1772 = vpop.permute.xlu0 %1771
    %v1774 = vadd.f32 %v1768, %v1772
    %v1775 = vtanh.pop %v1774
    %v1776 = vmul.f32 %v1767, %v1775
    %v1777 = vld [vmem:[#allocation5] sm:$0xff]
    %1779 = vrot.lane.b32.xlu0 %v1776, 80
    %v1780 = vpop.permute.xlu0 %1779
    %1783 = vrot.lane.b32.xlu0 %v1265, 80
    %v1784 = vpop.permute.xlu0 %1783
    %vm1786 = vcmask 130048
    %v1787 = vsel %vm1786, %v1777, %v1780
    %vm1788 = vcmask 392192
    %v1789 = vsel %vm1788, %v1787, %v1784
    %v1790 = vpack.c.bf16 %v1789, %v1789
    %v1791 = vld [vmem:[%s8] sm:$0xf]
    %v1792 = vld [vmem:[%s8 + $0x4] sm:$0xf]
    %v1793 = vld [vmem:[%s8 + $0x8] sm:$0xf]
    %v1794 = vld [vmem:[%s8 + $0xc] sm:$0xf]
    %v1795 = vld [vmem:[%s8 + $0x10] sm:$0xf]
    %v1796 = vld [vmem:[%s8 + $0x14] sm:$0xf]
    %v1797 = vld [vmem:[%s8 + $0x18] sm:$0xf]
    %v1798 = vld [vmem:[%s8 + $0x1c] sm:$0xf]
    %v1799 = vld [vmem:[%s8 + $0x20] sm:$0xf]
    %v1800 = vld [vmem:[%s8 + $0x24] sm:$0xf]
    %v1801 = vld [vmem:[%s9] sm:$0x1]
    %v1803 = vlaneseq
    %v1804 = vshrl.u32 %v1803, 7
    %v1805 = vsub.s32 0, %v1804
    %v1806 = vrot.slane %v1801, %v1805
    %v1818 = vunpack.c.l.b16 %v1791
    %v1819 = vunpack.c.l.b16 %v1792
    %v1820 = vunpack.c.l.b16 %v1793
    %v1821 = vunpack.c.l.b16 %v1794
    %v1822 = vunpack.c.l.b16 %v1795
    %v1823 = vunpack.c.l.b16 %v1796
    %v1824 = vunpack.c.l.b16 %v1797
    %v1825 = vunpack.c.l.b16 %v1798
    %v1826 = vunpack.c.l.b16 %v1799
    %v1827 = vunpack.c.l.b16 %v1800
    %v1828 = vpack.c.b16 %v1819, %v1818
    %v1829 = vpack.c.b16 %v1821, %v1820
    %v1830 = vpack.c.b16 %v1823, %v1822
    %v1831 = vpack.c.b16 %v1825, %v1824
    %v1832 = vpack.c.b16 %v1827, %v1826
    %vm1838 = vcmask 654336
    %v1840 = vsel %vm1838, %v1790, 0
    %1842 = vmatprep.subr.bf16.mxu0 0
    %1843 = vmatpush1.bf16.msra.mxu0 0
    %1844 = vmatprep.subr.bf16.mxu0 0
    %1845 = vmatpush1.bf16.msra.mxu0 0
    %1846 = vmatprep.subr.bf16.mxu0 0
    %1847 = vmatpush1.bf16.msra.mxu0 0
    %1848 = vmatprep.subr.bf16.mxu0 0
    %1849 = vmatpush1.bf16.msra.mxu0 %v1832
    %1850 = vmatprep.subr.bf16.mxu0 0
    %1851 = vmatpush1.bf16.msra.mxu0 %v1831
    %1852 = vmatprep.subr.bf16.mxu0 0
    %1853 = vmatpush1.bf16.msra.mxu0 %v1830
    %1854 = vmatprep.subr.bf16.mxu0 0
    %1855 = vmatpush1.bf16.msra.mxu0 %v1829
    %1856 = vmatprep.subr.bf16.mxu0 0
    %1857 = vmatpush1.bf16.msra.mxu0 %v1828
    %1858 = vmatprep.subr.bf16.mxu0 0
    %1859 = vmatpush2.bf16.msra.mxu0 0
    %1860 = vmatprep.subr.bf16.mxu0 0
    %1861 = vmatpush2.bf16.msra.mxu0 0
    %1862 = vmatprep.subr.bf16.mxu0 0
    %1863 = vmatpush2.bf16.msra.mxu0 0
    %1864 = vmatprep.subr.bf16.mxu0 0
    %1865 = vmatpush2.bf16.msra.mxu0 0
    %1866 = vmatprep.subr.bf16.mxu0 0
    %1867 = vmatpush2.bf16.msra.mxu0 0
    %1868 = vmatprep.subr.bf16.mxu0 0
    %1869 = vmatpush2.bf16.msra.mxu0 0
    %1870 = vmatprep.subr.bf16.mxu0 0
    %1871 = vmatpush2.bf16.msra.mxu0 0
    %1872 = vmatprep.subr.bf16.mxu0 0
    %1873 = vmatpush2.bf16.msra.mxu0 0
    %1874 = vmatprep.mubr.bf16.mxu0 0
    %1875 = vmatmul.mubr.bf16.gmra.mxu0 %v1840
    %v1876 = vpop.f32.mrf.mxu0
    %v1877 = vadd.f32 %v1806, %v1876
    %v1878 = vpop.f32.mrf.mxu0
    %v1879 = vpop.f32.mrf.mxu0
    %v1880 = vpop.f32.mrf.mxu0
    %1881 = vdwg.mxu0
    %v1882 = vmax.f32 %v1877, 0.0
    %v1883 = vpack.c.bf16 %v1882, %v1882
    %v1884 = vld [vmem:[%s10] sm:$0xf]
    %v1885 = vld [vmem:[%s10 + $0x4] sm:$0xf]
    %v1886 = vld [vmem:[%s10 + $0x8] sm:$0xf]
    %v1887 = vld [vmem:[%s10 + $0xc] sm:$0xf]
    %v1888 = vld [vmem:[%s10 + $0x10] sm:$0xf]
    %v1889 = vld [vmem:[%s10 + $0x14] sm:$0xf]
    %v1890 = vld [vmem:[%s10 + $0x18] sm:$0xf]
    %v1891 = vld [vmem:[%s10 + $0x1c] sm:$0xf]
    %v1892 = vld [vmem:[%s11] sm:$0x1]
    %v1894 = vlaneseq
    %v1895 = vshrl.u32 %v1894, 7
    %v1896 = vsub.s32 0, %v1895
    %v1897 = vrot.slane %v1892, %v1896
    %v1907 = vunpack.c.l.b16 %v1884
    %v1908 = vunpack.c.l.b16 %v1885
    %v1909 = vunpack.c.l.b16 %v1886
    %v1910 = vunpack.c.l.b16 %v1887
    %v1911 = vunpack.c.l.b16 %v1888
    %v1912 = vunpack.c.l.b16 %v1889
    %v1913 = vunpack.c.l.b16 %v1890
    %v1914 = vunpack.c.l.b16 %v1891
    %v1915 = vpack.c.b16 %v1908, %v1907
    %v1916 = vpack.c.b16 %v1910, %v1909
    %v1917 = vpack.c.b16 %v1912, %v1911
    %v1918 = vpack.c.b16 %v1914, %v1913
    %v1924 = vsel %vm213, %v1883, 0
    %1926 = vmatprep.subr.bf16.mxu0 0
    %1927 = vmatpush1.bf16.msra.mxu0 0
    %1928 = vmatprep.subr.bf16.mxu0 0
    %1929 = vmatpush1.bf16.msra.mxu0 0
    %1930 = vmatprep.subr.bf16.mxu0 0
    %1931 = vmatpush1.bf16.msra.mxu0 0
    %1932 = vmatprep.subr.bf16.mxu0 0
    %1933 = vmatpush1.bf16.msra.mxu0 0
    %1934 = vmatprep.subr.bf16.mxu0 0
    %1935 = vmatpush1.bf16.msra.mxu0 %v1918
    %1936 = vmatprep.subr.bf16.mxu0 0
    %1937 = vmatpush1.bf16.msra.mxu0 %v1917
    %1938 = vmatprep.subr.bf16.mxu0 0
    %1939 = vmatpush1.bf16.msra.mxu0 %v1916
    %1940 = vmatprep.subr.bf16.mxu0 0
    %1941 = vmatpush1.bf16.msra.mxu0 %v1915
    %1942 = vmatprep.subr.bf16.mxu0 0
    %1943 = vmatpush2.bf16.msra.mxu0 0
    %1944 = vmatprep.subr.bf16.mxu0 0
    %1945 = vmatpush2.bf16.msra.mxu0 0
    %1946 = vmatprep.subr.bf16.mxu0 0
    %1947 = vmatpush2.bf16.msra.mxu0 0
    %1948 = vmatprep.subr.bf16.mxu0 0
    %1949 = vmatpush2.bf16.msra.mxu0 0
    %1950 = vmatprep.subr.bf16.mxu0 0
    %1951 = vmatpush2.bf16.msra.mxu0 0
    %1952 = vmatprep.subr.bf16.mxu0 0
    %1953 = vmatpush2.bf16.msra.mxu0 0
    %1954 = vmatprep.subr.bf16.mxu0 0
    %1955 = vmatpush2.bf16.msra.mxu0 0
    %1956 = vmatprep.subr.bf16.mxu0 0
    %1957 = vmatpush2.bf16.msra.mxu0 0
    %1958 = vmatprep.mubr.bf16.mxu0 0
    %1959 = vmatmul.mubr.bf16.gmra.mxu0 %v1924
    %v1960 = vpop.f32.mrf.mxu0
    %v1961 = vadd.f32 %v1897, %v1960
    %v1962 = vpop.f32.mrf.mxu0
    %v1963 = vpop.f32.mrf.mxu0
    %v1964 = vpop.f32.mrf.mxu0
    %1965 = vdwg.mxu0
    %v1966 = vmax.f32 %v1961, 0.0
    %v1967 = vpack.c.bf16 %v1966, %v1966
    %v1968 = vld [vmem:[%s12] sm:$0xf]
    %v1969 = vld [vmem:[%s12 + $0x4] sm:$0xf]
    %v1970 = vld [vmem:[%s12 + $0x8] sm:$0xf]
    %v1971 = vld [vmem:[%s12 + $0xc] sm:$0xf]
    %v1972 = vld [vmem:[#allocation2] sm:$0x1]
    %v1974 = vlaneseq
    %v1975 = vshrl.u32 %v1974, 7
    %v1976 = vsub.s32 0, %v1975
    %v1977 = vrot.slane %v1972, %v1976
    %v1983 = vunpack.c.l.b16 %v1968
    %v1984 = vunpack.c.l.b16 %v1969
    %v1985 = vunpack.c.l.b16 %v1970
    %v1986 = vunpack.c.l.b16 %v1971
    %v1987 = vpack.c.b16 %v1984, %v1983
    %v1988 = vpack.c.b16 %v1986, %v1985
    %vm1991 = vcmask 261120
    %v1993 = vsel %vm1991, %v1967, 0
    %1995 = vmatprep.subr.bf16.mxu0 0
    %1996 = vmatpush1.bf16.msra.mxu0 0
    %1997 = vmatprep.subr.bf16.mxu0 0
    %1998 = vmatpush1.bf16.msra.mxu0 0
    %1999 = vmatprep.subr.bf16.mxu0 0
    %2000 = vmatpush1.bf16.msra.mxu0 0
    %2001 = vmatprep.subr.bf16.mxu0 0
    %2002 = vmatpush1.bf16.msra.mxu0 0
    %2003 = vmatprep.subr.bf16.mxu0 0
    %2004 = vmatpush1.bf16.msra.mxu0 0
    %2005 = vmatprep.subr.bf16.mxu0 0
    %2006 = vmatpush1.bf16.msra.mxu0 0
    %2007 = vmatprep.subr.bf16.mxu0 0
    %2008 = vmatpush1.bf16.msra.mxu0 %v1988
    %2009 = vmatprep.subr.bf16.mxu0 0
    %2010 = vmatpush1.bf16.msra.mxu0 %v1987
    %2011 = vmatprep.subr.bf16.mxu0 0
    %2012 = vmatpush2.bf16.msra.mxu0 0
    %2013 = vmatprep.subr.bf16.mxu0 0
    %2014 = vmatpush2.bf16.msra.mxu0 0
    %2015 = vmatprep.subr.bf16.mxu0 0
    %2016 = vmatpush2.bf16.msra.mxu0 0
    %2017 = vmatprep.subr.bf16.mxu0 0
    %2018 = vmatpush2.bf16.msra.mxu0 0
    %2019 = vmatprep.subr.bf16.mxu0 0
    %2020 = vmatpush2.bf16.msra.mxu0 0
    %2021 = vmatprep.subr.bf16.mxu0 0
    %2022 = vmatpush2.bf16.msra.mxu0 0
    %2023 = vmatprep.subr.bf16.mxu0 0
    %2024 = vmatpush2.bf16.msra.mxu0 0
    %2025 = vmatprep.subr.bf16.mxu0 0
    %2026 = vmatpush2.bf16.msra.mxu0 0
    %2027 = vmatprep.mubr.bf16.mxu0 0
    %2028 = vmatmul.mubr.bf16.gmra.mxu0 %v1993
    %v2029 = vpop.f32.mrf.mxu0
    %v2030 = vadd.f32 %v1977, %v2029
    %v2031 = vpop.f32.mrf.mxu0
    %v2032 = vpop.f32.mrf.mxu0
    %v2033 = vpop.f32.mrf.mxu0
    %2034 = vdwg.mxu0
    %v2035 = vmax.f32 %v2030, 0.0
    %v2036 = vmin.f32 %v2035, 1.0
    %vm2037 = vcmask 7168
    %2038 = vst.msk [vmem:[%s14] sm:$0xff] %vm2037, %v2036
    // Predicated region
    $region78: #{tpu_custom_call.1} parent=1 // pred_check
      _
    $region79: #{tpu_custom_call.1} parent=1 // pred_check_branch
      %2040 = sbr.rel (0) target = $region81
    $region80: #{tpu_custom_call.1} parent=1 // pred_region
      _
    $region81: #{tpu_custom_call.1} parent=1 // pred_fallthru
      _
    // Predicated region
    $region82: #{tpu_custom_call.1} parent=1 // pred_check
      _
    $region83: #{tpu_custom_call.1} parent=1 // pred_check_branch
      %2042 = sbr.rel (0) target = $region85
    $region84: #{tpu_custom_call.1} parent=1 // pred_region
      _
    $region85: #{tpu_custom_call.1} parent=1 // pred_fallthru
      _
    %2043 = vsyncpa [#allocation4], 1
    %2044 = vsyncpa [#allocation6], 1
    %2045 = vsyncpa [#allocation9], 1

</llo_original>
